<compile_context>
chip_gen: v6e
topology: v6e:2x2x1
jax: 0.10.0
libtpu: 0.0.40
codegen_flags: <defaults>
</compile_context>

<pallas_src>
import math

import jax
import jax.numpy as jnp
import numpy as np
from jax import lax
from jax.experimental import pallas as pl
from jax.experimental.pallas import tpu as pltpu


# ---------------------------------------------------------------------------
# Pallas kernel: one batch *tile* (Bt rows) per grid step.
# ---------------------------------------------------------------------------
def embed_atten_kernel(
    seqs_ref,    # [T, Bt, Din]  bf16   time-major batch tile
    w_i_ref,     # [Din, 3H]     bf16   fused GRU input weights  (gate order r|z|n)
    w_h_ref,     # [H, 3H]       bf16   fused GRU hidden weights (gate order r|z|n)
    b_i_ref,     # [1, 3H]       f32    b_ih with r/z halves of b_hh folded in
    b_hn_ref,    # [1, H]        f32    n-gate slice of b_hh
    w_vqk_ref,   # [H, 3H]       bf16   fused value|query|key weights
    b_vqk_ref,   # [1, 3H]       f32
    w_o_ref,     # [H, DoutP]    bf16   output weights, lane-padded to 128k
    b_o_ref,     # [1, DoutP]    f32
    bias_ref,    # [T*Bc, T*Bc]  f32    additive same-batch mask (0 / -1e30)
    out_ref,     # [Bt, DoutP]   f32    lane-dense output block
    xproj_ref,   # VMEM scratch [T, Bt, 3H] f32
    lat_ref,     # VMEM scratch [T, Bt, H]  f32
    vqk_ref,     # VMEM scratch [T, Bt, 3H] f32
):
    T, Bt, Din = seqs_ref.shape
    H = w_h_ref.shape[0]
    n_rows = bias_ref.shape[0]          # = T * Bc
    Bc = n_rows // T
    n_chunks = Bt // Bc
    f32, bf16 = jnp.float32, jnp.bfloat16

    # ---- hoisted input projection for all timesteps (one MXU call) ---------
    x = seqs_ref[...].reshape(T * Bt, Din)                  # layout no-op (Bt%8==0)
    xproj = jnp.dot(x, w_i_ref[...], preferred_element_type=f32) + b_i_ref[...]
    xproj_ref[...] = xproj.reshape(T, Bt, 3 * H)            # staged in VMEM

    # ---- GRU recurrence (PyTorch gate order r, z, n) ------------------------
    w_h = w_h_ref[...]
    b_hn = jnp.broadcast_to(b_hn_ref[...], (Bt, H))         # hoisted broadcast

    def gru_step(t, h):
        gi = xproj_ref[t]                                    # [Bt, 3H] per-step vld
        gh = jnp.dot(h.astype(bf16), w_h, preferred_element_type=f32)
        r = jax.nn.sigmoid(gi[:, :H] + gh[:, :H])            # r/z biases pre-folded
        z = jax.nn.sigmoid(gi[:, H:2 * H] + gh[:, H:2 * H])
        n = jnp.tanh(gi[:, 2 * H:] + r * (gh[:, 2 * H:] + b_hn))
        h = (1.0 - z) * n + z * h
        lat_ref[t] = h                                        # dense time-major store
        return h

    lax.fori_loop(0, T, gru_step, jnp.zeros((Bt, H), f32), unroll=True)

    # ---- fused value|query|key projection (one MXU call, staged in VMEM) ---
    lat_flat = lat_ref[...].reshape(T * Bt, H)
    vqk = (jnp.dot(lat_flat.astype(bf16), w_vqk_ref[...],
                   preferred_element_type=f32) + b_vqk_ref[...])
    vqk_ref[...] = vqk.reshape(T, Bt, 3 * H)

    # ---- TransformerAttn + sum over time, per batch sub-chunk ---------------
    # Time-major flat rows (row = t*Bc + b); one [T*Bc, T*Bc] matmul with an
    # additive same-batch mask replaces 2*Bc tiny batched [T,T] MXU pushes and
    # needs no time-major -> batch-major relayout.
    inv_sqrt_h = 1.0 / math.sqrt(H)
    bias = bias_ref[...]
    nt_dims = (((1,), (1,)), ((), ()))          # contract last dims: a @ b.T

    out_parts = []
    for ci in range(n_chunks):                  # static; 1 chunk while Bt*T<=256
        b0 = ci * Bc
        blk = vqk_ref[:, b0:b0 + Bc, :].reshape(T * Bc, 3 * H)
        value = blk[:, :H].astype(bf16)
        query = blk[:, H:2 * H].astype(bf16)
        keys = blk[:, 2 * H:].astype(bf16)

        logits = lax.dot_general(value, query, nt_dims,
                                 preferred_element_type=f32) * inv_sqrt_h + bias
        logits = logits - jnp.max(logits, axis=-1, keepdims=True)
        e = jnp.exp(logits)
        probs = e * pl.reciprocal(jnp.sum(e, axis=-1, keepdims=True), approx=True)

        attn = jnp.dot(probs.astype(bf16), keys,
                       preferred_element_type=f32)            # [T*Bc, H]
        lat_c = lat_ref[:, b0:b0 + Bc, :].reshape(T * Bc, H)
        gated = attn * lat_c
        out_parts.append(gated.reshape(T, Bc, H).sum(axis=0))  # sum over time

    summed = out_parts[0] if n_chunks == 1 else jnp.concatenate(out_parts, axis=0)

    # ---- out_layer: Linear + Tanh (+ Dropout(p=0) == identity) -------------
    out_ref[...] = jnp.tanh(
        jnp.dot(summed.astype(bf16), w_o_ref[...],
                preferred_element_type=f32) + b_o_ref[...])


# ---------------------------------------------------------------------------
# Wrapper: tile sizing + parameter fusion / packing (glue) + pallas_call.
# ---------------------------------------------------------------------------
def _round_up(x, m):
    return ((x + m - 1) // m) * m


def embed_atten_seq(seqs_tbd, params, *, batch_tile=128, min_grid=2):
    """seqs_tbd: [T, B, dim_seq_in] time-major (PyTorch nn.GRU default)."""
    (W_ih, W_hh, b_ih, b_hh, Wv, bv, Wq, bq, Wk, bk, Wo, bo) = params
    T, B, Din = seqs_tbd.shape
    H = W_hh.shape[1]
    Dout = Wo.shape[0]
    f32, bf16 = jnp.float32, jnp.bfloat16

    # ---- tile sizing --------------------------------------------------------
    # Attention sub-chunk: Bc*T <= 256 keeps the masked full matmul inside one
    # MXU tile (256 rows on v6e/v7x; also fine on v5e).
    max_bc = max(8, ((256 // T) // 8) * 8)
    # Batch tile: as large as allowed, multiple of 8, but keep >= min_grid grid
    # steps when the batch allows it (feeds both TensorCores on v7x).
    Bt = _round_up(min(batch_tile, B), 8)
    Bt = min(Bt, max(8, _round_up(int(pl.cdiv(B, min_grid)), 8)))
    if Bt <= max_bc:
        Bc = Bt
    else:
        Bc = max_bc
        Bt = max(Bc, (Bt // Bc) * Bc)    # Bt must be a multiple of Bc
    B_pad = _round_up(B, Bt)
    n_tiles = B_pad // Bt

    seqs = seqs_tbd
    if B_pad != B:                       # pad batch; padded rows are discarded
        seqs = jnp.pad(seqs_tbd, ((0, 0), (0, B_pad - B), (0, 0)))
    seqs = seqs.astype(bf16)             # bf16 MXU operand, halves the DMA

    # ---- parameter fusion / packing (bf16 MXU weights, f32 biases) ----------
    w_i = W_ih.T.astype(bf16)                                  # [Din, 3H]
    w_h = W_hh.T.astype(bf16)                                  # [H, 3H]
    # r/z halves of the hidden bias fold into the input bias; the n-gate half
    # must stay inside the recurrence (it is multiplied by the reset gate).
    b_i = jnp.concatenate([b_ih[:2 * H] + b_hh[:2 * H],
                           b_ih[2 * H:]]).reshape(1, 3 * H).astype(f32)
    b_hn = b_hh[2 * H:].reshape(1, H).astype(f32)

    w_vqk = jnp.concatenate([Wv.T, Wq.T, Wk.T], axis=1).astype(bf16)   # [H, 3H]
    b_vqk = jnp.concatenate([bv, bq, bk]).reshape(1, 3 * H).astype(f32)

    # Lane-dense output: pad Dout up to a multiple of 128 so the final store is
    # an unmasked full-lane vst instead of 16-lane masked partial stores.
    Dout_pad = _round_up(Dout, 128)
    w_o = jnp.pad(Wo.T, ((0, 0), (0, Dout_pad - Dout))).astype(bf16)   # [H, DoutP]
    b_o = jnp.pad(bo, (0, Dout_pad - Dout)).reshape(1, Dout_pad).astype(f32)

    # Additive same-batch mask for the time-major flat attention chunk:
    # row i = t*Bc + b attends only to cols j with (j % Bc) == (i % Bc).
    n_rows = T * Bc
    ar = np.arange(n_rows)
    bias_np = np.where((ar[:, None] % Bc) == (ar[None, :] % Bc),
                       0.0, -1e30).astype(np.float32)
    attn_bias = jnp.asarray(bias_np)

    inputs = (seqs, w_i, w_h, b_i, b_hn, w_vqk, b_vqk, w_o, b_o, attn_bias)

    def whole(x):
        nd = x.ndim
        return pl.BlockSpec(x.shape, lambda i, _nd=nd: (0,) * _nd)

    in_specs = [pl.BlockSpec((T, Bt, Din), lambda i: (0, i, 0))]
    in_specs += [whole(x) for x in inputs[1:]]

    out = pl.pallas_call(
        embed_atten_kernel,
        out_shape=jax.ShapeDtypeStruct((B_pad, Dout_pad), jnp.float32),
        grid=(n_tiles,),
        in_specs=in_specs,
        out_specs=pl.BlockSpec((Bt, Dout_pad), lambda i: (i, 0)),
        scratch_shapes=[pltpu.VMEM((T, Bt, 3 * H), jnp.float32),   # xproj
                        pltpu.VMEM((T, Bt, H), jnp.float32),       # latents
                        pltpu.VMEM((T, Bt, 3 * H), jnp.float32)],  # v|q|k
        compiler_params=pltpu.CompilerParams(
            dimension_semantics=("parallel",)),   # 2 TCs on v7x; no-op v5e/v6e
    )(*inputs)
    return out[:B, :Dout]


# ---------------------------------------------------------------------------
# Pure-JAX reference (mirrors the PyTorch forward).
# ---------------------------------------------------------------------------
def reference(seqs, params):
    (W_ih, W_hh, b_ih, b_hh, Wv, bv, Wq, bq, Wk, bk, Wo, bo) = params
    T, B, Din = seqs.shape
    H = W_hh.shape[1]

    def step(h, x_t):
        gi = x_t @ W_ih.T + b_ih
        gh = h @ W_hh.T + b_hh
        r = jax.nn.sigmoid(gi[:, :H] + gh[:, :H])
        z = jax.nn.sigmoid(gi[:, H:2 * H] + gh[:, H:2 * H])
        n = jnp.tanh(gi[:, 2 * H:] + r * gh[:, 2 * H:])
        h_new = (1.0 - z) * n + z * h
        return h_new, h_new

    _, latent = lax.scan(step, jnp.zeros((B, H), jnp.float32), seqs)  # [T,B,H]
    seq_in = jnp.transpose(latent, (1, 0, 2))                          # [B,T,H]
    value = seq_in @ Wv.T + bv
    query = seq_in @ Wq.T + bq
    keys = seq_in @ Wk.T + bk
    w = jnp.einsum("btv,bsv->bts", value, query) / math.sqrt(H)
    w = jax.nn.softmax(w, axis=-1)
    attn = jnp.einsum("bts,bsh->bth", w, keys)                         # [B,T,H]
    gated = jnp.transpose(attn, (1, 0, 2)) * latent                    # [T,B,H]
    summed = gated.sum(0)                                              # [B,H]
    return jnp.tanh(summed @ Wo.T + bo)


if __name__ == "__main__":
    # Small shapes consistent with the module's forward:
    #   dim_seq_in=8, rnn_out=32, dim_out=16, seq_len=8, batch=16.
    T, B, Din, H, Dout = 8, 16, 8, 32, 16

    key = jax.random.PRNGKey(0)
    ks = jax.random.split(key, 13)

    def rnd(k, shape, scale=0.1):
        return jax.random.normal(k, shape, jnp.float32) * scale

    params = (
        rnd(ks[0], (3 * H, Din)),   # GRU weight_ih_l0
        rnd(ks[1], (3 * H, H)),     # GRU weight_hh_l0
        rnd(ks[2], (3 * H,)),       # GRU bias_ih_l0
        rnd(ks[3], (3 * H,)),       # GRU bias_hh_l0
        rnd(ks[4], (H, H)), rnd(ks[5], (H,)),          # value_layer
        rnd(ks[6], (H, H)), rnd(ks[7], (H,)),          # query_layer
        rnd(ks[8], (H, H)), rnd(ks[9], (H,)),          # key_layer
        rnd(ks[10], (Dout, H)), rnd(ks[11], (Dout,)),  # out_layer Linear
    )
    seqs = jax.random.normal(ks[12], (T, B, Din), jnp.float32)

    out = embed_atten_seq(seqs, params)
    jax.block_until_ready(out)

    ref = reference(seqs, params)
    np.testing.assert_allclose(np.asarray(out), np.asarray(ref),
                               atol=5e-2, rtol=5e-2)
    assert out.shape == (B, Dout)
    # TODO(synk): forward_mask (masked attention) variant not implemented.
    print("KERNEL_OK")
</pallas_src>

<mosaic_0001>
module attributes {stable_mosaic.version = 11 : i64} {
  func.func @embed_atten_kernel(%arg0: i32, %arg1: memref<8x8x8xbf16, #tpu.memory_space<vmem>>, %arg2: memref<8x96xbf16, #tpu.memory_space<vmem>>, %arg3: memref<32x96xbf16, #tpu.memory_space<vmem>>, %arg4: memref<1x96xf32, #tpu.memory_space<vmem>>, %arg5: memref<1x32xf32, #tpu.memory_space<vmem>>, %arg6: memref<32x96xbf16, #tpu.memory_space<vmem>>, %arg7: memref<1x96xf32, #tpu.memory_space<vmem>>, %arg8: memref<32x128xbf16, #tpu.memory_space<vmem>>, %arg9: memref<1x128xf32, #tpu.memory_space<vmem>>, %arg10: memref<64x64xf32, #tpu.memory_space<vmem>>, %arg11: memref<8x128xf32, #tpu.memory_space<vmem>>, %arg12: memref<8x8x96xf32, #tpu.memory_space<vmem>>, %arg13: memref<8x8x32xf32, #tpu.memory_space<vmem>>, %arg14: memref<8x8x96xf32, #tpu.memory_space<vmem>>) attributes {dimension_semantics = [#tpu.dimension_semantics<parallel>], iteration_bounds = array<i64: 2>, scalar_prefetch = 0 : i64, scratch_operands = 3 : i64, tpu.core_type = #tpu.core_type<tc>, window_params = [{transform_indices = @transform_0, window_bounds = array<i64: 8, 8, 8>}, {pipeline_mode = #tpu.pipeline_mode<synchronous>, transform_indices = @transform_1, window_bounds = array<i64: 8, 96>}, {pipeline_mode = #tpu.pipeline_mode<synchronous>, transform_indices = @transform_2, window_bounds = array<i64: 32, 96>}, {pipeline_mode = #tpu.pipeline_mode<synchronous>, transform_indices = @transform_3, window_bounds = array<i64: 1, 96>}, {pipeline_mode = #tpu.pipeline_mode<synchronous>, transform_indices = @transform_4, window_bounds = array<i64: 1, 32>}, {pipeline_mode = #tpu.pipeline_mode<synchronous>, transform_indices = @transform_5, window_bounds = array<i64: 32, 96>}, {pipeline_mode = #tpu.pipeline_mode<synchronous>, transform_indices = @transform_6, window_bounds = array<i64: 1, 96>}, {pipeline_mode = #tpu.pipeline_mode<synchronous>, transform_indices = @transform_7, window_bounds = array<i64: 32, 128>}, {pipeline_mode = #tpu.pipeline_mode<synchronous>, transform_indices = @transform_8, window_bounds = array<i64: 1, 128>}, {pipeline_mode = #tpu.pipeline_mode<synchronous>, transform_indices = @transform_9, window_bounds = array<i64: 64, 64>}, {transform_indices = @transform_10, window_bounds = array<i64: 8, 128>}]} {
    %c0 = arith.constant 0 : index
    %c0_0 = arith.constant 0 : index
    %c0_1 = arith.constant 0 : index
    %0 = vector.load %arg1[%c0, %c0_0, %c0_1] : memref<8x8x8xbf16, #tpu.memory_space<vmem>>, vector<8x8x8xbf16>
    %1 = vector.shape_cast %0 : vector<8x8x8xbf16> to vector<64x8xbf16>
    %c0_2 = arith.constant 0 : index
    %c0_3 = arith.constant 0 : index
    %2 = vector.load %arg2[%c0_2, %c0_3] : memref<8x96xbf16, #tpu.memory_space<vmem>>, vector<8x96xbf16>
    %cst = arith.constant dense<0.000000e+00> : vector<64x96xf32>
    %3 = tpu.matmul %1, %2, %cst {dimension_numbers = #tpu.dot_dimension_numbers<[1], [0], [0], [1], [0, 0, 1, 1], [], []>} : vector<64x8xbf16>, vector<8x96xbf16>, vector<64x96xf32> -> vector<64x96xf32>
    %c0_4 = arith.constant 0 : index
    %c0_5 = arith.constant 0 : index
    %4 = vector.load %arg4[%c0_4, %c0_5] : memref<1x96xf32, #tpu.memory_space<vmem>>, vector<1x96xf32>
    %5 = vector.broadcast %4 : vector<1x96xf32> to vector<64x96xf32>
    %6 = arith.addf %3, %5 : vector<64x96xf32>
    %7 = vector.shape_cast %6 : vector<64x96xf32> to vector<8x8x96xf32>
    %c0_6 = arith.constant 0 : index
    %c0_7 = arith.constant 0 : index
    %c0_8 = arith.constant 0 : index
    %8 = vector.load %arg12[%c0_6, %c0_7, %c0_8] : memref<8x8x96xf32, #tpu.memory_space<vmem>>, vector<8x8x96xf32>
    tpu.vector_store %arg12[%c0_6, %c0_7, %c0_8], %7 {strides = array<i32>} : memref<8x8x96xf32, #tpu.memory_space<vmem>>, vector<8x8x96xf32>,
    %c0_9 = arith.constant 0 : index
    %c0_10 = arith.constant 0 : index
    %9 = vector.load %arg3[%c0_9, %c0_10] : memref<32x96xbf16, #tpu.memory_space<vmem>>, vector<32x96xbf16>
    %c0_11 = arith.constant 0 : index
    %c0_12 = arith.constant 0 : index
    %10 = vector.load %arg5[%c0_11, %c0_12] : memref<1x32xf32, #tpu.memory_space<vmem>>, vector<1x32xf32>
    %11 = vector.shape_cast %10 : vector<1x32xf32> to vector<1x32xf32>
    %12 = vector.broadcast %11 : vector<1x32xf32> to vector<8x32xf32>
    %cst_13 = arith.constant 0.000000e+00 : f32
    %13 = vector.broadcast %cst_13 : f32 to vector<8x32xf32>
    %c0_i32 = arith.constant 0 : i32
    %14 = arith.index_cast %c0_i32 : i32 to index
    %c0_14 = arith.constant 0 : index
    %c0_15 = arith.constant 0 : index
    %15 = vector.load %arg12[%14, %c0_14, %c0_15] : memref<8x8x96xf32, #tpu.memory_space<vmem>>, vector<1x8x96xf32>
    %16 = vector.shape_cast %15 : vector<1x8x96xf32> to vector<8x96xf32>
    %17 = arith.truncf %13 : vector<8x32xf32> to vector<8x32xbf16>
    %cst_16 = arith.constant dense<0.000000e+00> : vector<8x96xf32>
    %18 = tpu.matmul %17, %9, %cst_16 {dimension_numbers = #tpu.dot_dimension_numbers<[1], [0], [0], [1], [0, 0, 1, 1], [], []>} : vector<8x32xbf16>, vector<32x96xbf16>, vector<8x96xf32> -> vector<8x96xf32>
    %19 = vector.extract_strided_slice %16 {offsets = [0, 0], sizes = [8, 32], strides = [1, 1]} : vector<8x96xf32> to vector<8x32xf32>
    %20 = vector.extract_strided_slice %18 {offsets = [0, 0], sizes = [8, 32], strides = [1, 1]} : vector<8x96xf32> to vector<8x32xf32>
    %21 = arith.addf %19, %20 : vector<8x32xf32>
    %22 = arith.negf %21 : vector<8x32xf32>
    %23 = math.exp %22 : vector<8x32xf32>
    %cst_17 = arith.constant 1.000000e+00 : f32
    %24 = vector.broadcast %cst_17 : f32 to vector<8x32xf32>
    %25 = arith.addf %24, %23 : vector<8x32xf32>
    %26 = arith.divf %24, %25 : vector<8x32xf32>
    %27 = vector.extract_strided_slice %16 {offsets = [0, 32], sizes = [8, 32], strides = [1, 1]} : vector<8x96xf32> to vector<8x32xf32>
    %28 = vector.extract_strided_slice %18 {offsets = [0, 32], sizes = [8, 32], strides = [1, 1]} : vector<8x96xf32> to vector<8x32xf32>
    %29 = arith.addf %27, %28 : vector<8x32xf32>
    %30 = arith.negf %29 : vector<8x32xf32>
    %31 = math.exp %30 : vector<8x32xf32>
    %cst_18 = arith.constant 1.000000e+00 : f32
    %32 = vector.broadcast %cst_18 : f32 to vector<8x32xf32>
    %33 = arith.addf %32, %31 : vector<8x32xf32>
    %34 = arith.divf %32, %33 : vector<8x32xf32>
    %35 = vector.extract_strided_slice %16 {offsets = [0, 64], sizes = [8, 32], strides = [1, 1]} : vector<8x96xf32> to vector<8x32xf32>
    %36 = vector.extract_strided_slice %18 {offsets = [0, 64], sizes = [8, 32], strides = [1, 1]} : vector<8x96xf32> to vector<8x32xf32>
    %37 = arith.addf %36, %12 : vector<8x32xf32>
    %38 = arith.mulf %26, %37 : vector<8x32xf32>
    %39 = arith.addf %35, %38 : vector<8x32xf32>
    %40 = math.tanh %39 : vector<8x32xf32>
    %cst_19 = arith.constant 1.000000e+00 : f32
    %41 = vector.broadcast %cst_19 : f32 to vector<8x32xf32>
    %42 = arith.subf %41, %34 : vector<8x32xf32>
    %43 = arith.mulf %42, %40 : vector<8x32xf32>
    %44 = arith.mulf %34, %13 : vector<8x32xf32>
    %45 = arith.addf %43, %44 : vector<8x32xf32>
    %46 = arith.index_cast %c0_i32 : i32 to index
    %c0_20 = arith.constant 0 : index
    %c0_21 = arith.constant 0 : index
    %47 = vector.load %arg13[%46, %c0_20, %c0_21] : memref<8x8x32xf32, #tpu.memory_space<vmem>>, vector<1x8x32xf32>
    %48 = vector.shape_cast %47 : vector<1x8x32xf32> to vector<8x32xf32>
    %49 = vector.shape_cast %45 : vector<8x32xf32> to vector<1x8x32xf32>
    tpu.vector_store %arg13[%46, %c0_20, %c0_21], %49 {strides = array<i32>} : memref<8x8x32xf32, #tpu.memory_space<vmem>>, vector<1x8x32xf32>,
    %c1_i32 = arith.constant 1 : i32
    %50 = arith.index_cast %c1_i32 : i32 to index
    %c0_22 = arith.constant 0 : index
    %c0_23 = arith.constant 0 : index
    %51 = vector.load %arg12[%50, %c0_22, %c0_23] : memref<8x8x96xf32, #tpu.memory_space<vmem>>, vector<1x8x96xf32>
    %52 = vector.shape_cast %51 : vector<1x8x96xf32> to vector<8x96xf32>
    %53 = arith.truncf %45 : vector<8x32xf32> to vector<8x32xbf16>
    %cst_24 = arith.constant dense<0.000000e+00> : vector<8x96xf32>
    %54 = tpu.matmul %53, %9, %cst_24 {dimension_numbers = #tpu.dot_dimension_numbers<[1], [0], [0], [1], [0, 0, 1, 1], [], []>} : vector<8x32xbf16>, vector<32x96xbf16>, vector<8x96xf32> -> vector<8x96xf32>
    %55 = vector.extract_strided_slice %52 {offsets = [0, 0], sizes = [8, 32], strides = [1, 1]} : vector<8x96xf32> to vector<8x32xf32>
    %56 = vector.extract_strided_slice %54 {offsets = [0, 0], sizes = [8, 32], strides = [1, 1]} : vector<8x96xf32> to vector<8x32xf32>
    %57 = arith.addf %55, %56 : vector<8x32xf32>
    %58 = arith.negf %57 : vector<8x32xf32>
    %59 = math.exp %58 : vector<8x32xf32>
    %cst_25 = arith.constant 1.000000e+00 : f32
    %60 = vector.broadcast %cst_25 : f32 to vector<8x32xf32>
    %61 = arith.addf %60, %59 : vector<8x32xf32>
    %62 = arith.divf %60, %61 : vector<8x32xf32>
    %63 = vector.extract_strided_slice %52 {offsets = [0, 32], sizes = [8, 32], strides = [1, 1]} : vector<8x96xf32> to vector<8x32xf32>
    %64 = vector.extract_strided_slice %54 {offsets = [0, 32], sizes = [8, 32], strides = [1, 1]} : vector<8x96xf32> to vector<8x32xf32>
    %65 = arith.addf %63, %64 : vector<8x32xf32>
    %66 = arith.negf %65 : vector<8x32xf32>
    %67 = math.exp %66 : vector<8x32xf32>
    %cst_26 = arith.constant 1.000000e+00 : f32
    %68 = vector.broadcast %cst_26 : f32 to vector<8x32xf32>
    %69 = arith.addf %68, %67 : vector<8x32xf32>
    %70 = arith.divf %68, %69 : vector<8x32xf32>
    %71 = vector.extract_strided_slice %52 {offsets = [0, 64], sizes = [8, 32], strides = [1, 1]} : vector<8x96xf32> to vector<8x32xf32>
    %72 = vector.extract_strided_slice %54 {offsets = [0, 64], sizes = [8, 32], strides = [1, 1]} : vector<8x96xf32> to vector<8x32xf32>
    %73 = arith.addf %72, %12 : vector<8x32xf32>
    %74 = arith.mulf %62, %73 : vector<8x32xf32>
    %75 = arith.addf %71, %74 : vector<8x32xf32>
    %76 = math.tanh %75 : vector<8x32xf32>
    %cst_27 = arith.constant 1.000000e+00 : f32
    %77 = vector.broadcast %cst_27 : f32 to vector<8x32xf32>
    %78 = arith.subf %77, %70 : vector<8x32xf32>
    %79 = arith.mulf %78, %76 : vector<8x32xf32>
    %80 = arith.mulf %70, %45 : vector<8x32xf32>
    %81 = arith.addf %79, %80 : vector<8x32xf32>
    %82 = arith.index_cast %c1_i32 : i32 to index
    %c0_28 = arith.constant 0 : index
    %c0_29 = arith.constant 0 : index
    %83 = vector.load %arg13[%82, %c0_28, %c0_29] : memref<8x8x32xf32, #tpu.memory_space<vmem>>, vector<1x8x32xf32>
    %84 = vector.shape_cast %83 : vector<1x8x32xf32> to vector<8x32xf32>
    %85 = vector.shape_cast %81 : vector<8x32xf32> to vector<1x8x32xf32>
    tpu.vector_store %arg13[%82, %c0_28, %c0_29], %85 {strides = array<i32>} : memref<8x8x32xf32, #tpu.memory_space<vmem>>, vector<1x8x32xf32>,
    %c2_i32 = arith.constant 2 : i32
    %86 = arith.index_cast %c2_i32 : i32 to index
    %c0_30 = arith.constant 0 : index
    %c0_31 = arith.constant 0 : index
    %87 = vector.load %arg12[%86, %c0_30, %c0_31] : memref<8x8x96xf32, #tpu.memory_space<vmem>>, vector<1x8x96xf32>
    %88 = vector.shape_cast %87 : vector<1x8x96xf32> to vector<8x96xf32>
    %89 = arith.truncf %81 : vector<8x32xf32> to vector<8x32xbf16>
    %cst_32 = arith.constant dense<0.000000e+00> : vector<8x96xf32>
    %90 = tpu.matmul %89, %9, %cst_32 {dimension_numbers = #tpu.dot_dimension_numbers<[1], [0], [0], [1], [0, 0, 1, 1], [], []>} : vector<8x32xbf16>, vector<32x96xbf16>, vector<8x96xf32> -> vector<8x96xf32>
    %91 = vector.extract_strided_slice %88 {offsets = [0, 0], sizes = [8, 32], strides = [1, 1]} : vector<8x96xf32> to vector<8x32xf32>
    %92 = vector.extract_strided_slice %90 {offsets = [0, 0], sizes = [8, 32], strides = [1, 1]} : vector<8x96xf32> to vector<8x32xf32>
    %93 = arith.addf %91, %92 : vector<8x32xf32>
    %94 = arith.negf %93 : vector<8x32xf32>
    %95 = math.exp %94 : vector<8x32xf32>
    %cst_33 = arith.constant 1.000000e+00 : f32
    %96 = vector.broadcast %cst_33 : f32 to vector<8x32xf32>
    %97 = arith.addf %96, %95 : vector<8x32xf32>
    %98 = arith.divf %96, %97 : vector<8x32xf32>
    %99 = vector.extract_strided_slice %88 {offsets = [0, 32], sizes = [8, 32], strides = [1, 1]} : vector<8x96xf32> to vector<8x32xf32>
    %100 = vector.extract_strided_slice %90 {offsets = [0, 32], sizes = [8, 32], strides = [1, 1]} : vector<8x96xf32> to vector<8x32xf32>
    %101 = arith.addf %99, %100 : vector<8x32xf32>
    %102 = arith.negf %101 : vector<8x32xf32>
    %103 = math.exp %102 : vector<8x32xf32>
    %cst_34 = arith.constant 1.000000e+00 : f32
    %104 = vector.broadcast %cst_34 : f32 to vector<8x32xf32>
    %105 = arith.addf %104, %103 : vector<8x32xf32>
    %106 = arith.divf %104, %105 : vector<8x32xf32>
    %107 = vector.extract_strided_slice %88 {offsets = [0, 64], sizes = [8, 32], strides = [1, 1]} : vector<8x96xf32> to vector<8x32xf32>
    %108 = vector.extract_strided_slice %90 {offsets = [0, 64], sizes = [8, 32], strides = [1, 1]} : vector<8x96xf32> to vector<8x32xf32>
    %109 = arith.addf %108, %12 : vector<8x32xf32>
    %110 = arith.mulf %98, %109 : vector<8x32xf32>
    %111 = arith.addf %107, %110 : vector<8x32xf32>
    %112 = math.tanh %111 : vector<8x32xf32>
    %cst_35 = arith.constant 1.000000e+00 : f32
    %113 = vector.broadcast %cst_35 : f32 to vector<8x32xf32>
    %114 = arith.subf %113, %106 : vector<8x32xf32>
    %115 = arith.mulf %114, %112 : vector<8x32xf32>
    %116 = arith.mulf %106, %81 : vector<8x32xf32>
    %117 = arith.addf %115, %116 : vector<8x32xf32>
    %118 = arith.index_cast %c2_i32 : i32 to index
    %c0_36 = arith.constant 0 : index
    %c0_37 = arith.constant 0 : index
    %119 = vector.load %arg13[%118, %c0_36, %c0_37] : memref<8x8x32xf32, #tpu.memory_space<vmem>>, vector<1x8x32xf32>
    %120 = vector.shape_cast %119 : vector<1x8x32xf32> to vector<8x32xf32>
    %121 = vector.shape_cast %117 : vector<8x32xf32> to vector<1x8x32xf32>
    tpu.vector_store %arg13[%118, %c0_36, %c0_37], %121 {strides = array<i32>} : memref<8x8x32xf32, #tpu.memory_space<vmem>>, vector<1x8x32xf32>,
    %c3_i32 = arith.constant 3 : i32
    %122 = arith.index_cast %c3_i32 : i32 to index
    %c0_38 = arith.constant 0 : index
    %c0_39 = arith.constant 0 : index
    %123 = vector.load %arg12[%122, %c0_38, %c0_39] : memref<8x8x96xf32, #tpu.memory_space<vmem>>, vector<1x8x96xf32>
    %124 = vector.shape_cast %123 : vector<1x8x96xf32> to vector<8x96xf32>
    %125 = arith.truncf %117 : vector<8x32xf32> to vector<8x32xbf16>
    %cst_40 = arith.constant dense<0.000000e+00> : vector<8x96xf32>
    %126 = tpu.matmul %125, %9, %cst_40 {dimension_numbers = #tpu.dot_dimension_numbers<[1], [0], [0], [1], [0, 0, 1, 1], [], []>} : vector<8x32xbf16>, vector<32x96xbf16>, vector<8x96xf32> -> vector<8x96xf32>
    %127 = vector.extract_strided_slice %124 {offsets = [0, 0], sizes = [8, 32], strides = [1, 1]} : vector<8x96xf32> to vector<8x32xf32>
    %128 = vector.extract_strided_slice %126 {offsets = [0, 0], sizes = [8, 32], strides = [1, 1]} : vector<8x96xf32> to vector<8x32xf32>
    %129 = arith.addf %127, %128 : vector<8x32xf32>
    %130 = arith.negf %129 : vector<8x32xf32>
    %131 = math.exp %130 : vector<8x32xf32>
    %cst_41 = arith.constant 1.000000e+00 : f32
    %132 = vector.broadcast %cst_41 : f32 to vector<8x32xf32>
    %133 = arith.addf %132, %131 : vector<8x32xf32>
    %134 = arith.divf %132, %133 : vector<8x32xf32>
    %135 = vector.extract_strided_slice %124 {offsets = [0, 32], sizes = [8, 32], strides = [1, 1]} : vector<8x96xf32> to vector<8x32xf32>
    %136 = vector.extract_strided_slice %126 {offsets = [0, 32], sizes = [8, 32], strides = [1, 1]} : vector<8x96xf32> to vector<8x32xf32>
    %137 = arith.addf %135, %136 : vector<8x32xf32>
    %138 = arith.negf %137 : vector<8x32xf32>
    %139 = math.exp %138 : vector<8x32xf32>
    %cst_42 = arith.constant 1.000000e+00 : f32
    %140 = vector.broadcast %cst_42 : f32 to vector<8x32xf32>
    %141 = arith.addf %140, %139 : vector<8x32xf32>
    %142 = arith.divf %140, %141 : vector<8x32xf32>
    %143 = vector.extract_strided_slice %124 {offsets = [0, 64], sizes = [8, 32], strides = [1, 1]} : vector<8x96xf32> to vector<8x32xf32>
    %144 = vector.extract_strided_slice %126 {offsets = [0, 64], sizes = [8, 32], strides = [1, 1]} : vector<8x96xf32> to vector<8x32xf32>
    %145 = arith.addf %144, %12 : vector<8x32xf32>
    %146 = arith.mulf %134, %145 : vector<8x32xf32>
    %147 = arith.addf %143, %146 : vector<8x32xf32>
    %148 = math.tanh %147 : vector<8x32xf32>
    %cst_43 = arith.constant 1.000000e+00 : f32
    %149 = vector.broadcast %cst_43 : f32 to vector<8x32xf32>
    %150 = arith.subf %149, %142 : vector<8x32xf32>
    %151 = arith.mulf %150, %148 : vector<8x32xf32>
    %152 = arith.mulf %142, %117 : vector<8x32xf32>
    %153 = arith.addf %151, %152 : vector<8x32xf32>
    %154 = arith.index_cast %c3_i32 : i32 to index
    %c0_44 = arith.constant 0 : index
    %c0_45 = arith.constant 0 : index
    %155 = vector.load %arg13[%154, %c0_44, %c0_45] : memref<8x8x32xf32, #tpu.memory_space<vmem>>, vector<1x8x32xf32>
    %156 = vector.shape_cast %155 : vector<1x8x32xf32> to vector<8x32xf32>
    %157 = vector.shape_cast %153 : vector<8x32xf32> to vector<1x8x32xf32>
    tpu.vector_store %arg13[%154, %c0_44, %c0_45], %157 {strides = array<i32>} : memref<8x8x32xf32, #tpu.memory_space<vmem>>, vector<1x8x32xf32>,
    %c4_i32 = arith.constant 4 : i32
    %158 = arith.index_cast %c4_i32 : i32 to index
    %c0_46 = arith.constant 0 : index
    %c0_47 = arith.constant 0 : index
    %159 = vector.load %arg12[%158, %c0_46, %c0_47] : memref<8x8x96xf32, #tpu.memory_space<vmem>>, vector<1x8x96xf32>
    %160 = vector.shape_cast %159 : vector<1x8x96xf32> to vector<8x96xf32>
    %161 = arith.truncf %153 : vector<8x32xf32> to vector<8x32xbf16>
    %cst_48 = arith.constant dense<0.000000e+00> : vector<8x96xf32>
    %162 = tpu.matmul %161, %9, %cst_48 {dimension_numbers = #tpu.dot_dimension_numbers<[1], [0], [0], [1], [0, 0, 1, 1], [], []>} : vector<8x32xbf16>, vector<32x96xbf16>, vector<8x96xf32> -> vector<8x96xf32>
    %163 = vector.extract_strided_slice %160 {offsets = [0, 0], sizes = [8, 32], strides = [1, 1]} : vector<8x96xf32> to vector<8x32xf32>
    %164 = vector.extract_strided_slice %162 {offsets = [0, 0], sizes = [8, 32], strides = [1, 1]} : vector<8x96xf32> to vector<8x32xf32>
    %165 = arith.addf %163, %164 : vector<8x32xf32>
    %166 = arith.negf %165 : vector<8x32xf32>
    %167 = math.exp %166 : vector<8x32xf32>
    %cst_49 = arith.constant 1.000000e+00 : f32
    %168 = vector.broadcast %cst_49 : f32 to vector<8x32xf32>
    %169 = arith.addf %168, %167 : vector<8x32xf32>
    %170 = arith.divf %168, %169 : vector<8x32xf32>
    %171 = vector.extract_strided_slice %160 {offsets = [0, 32], sizes = [8, 32], strides = [1, 1]} : vector<8x96xf32> to vector<8x32xf32>
    %172 = vector.extract_strided_slice %162 {offsets = [0, 32], sizes = [8, 32], strides = [1, 1]} : vector<8x96xf32> to vector<8x32xf32>
    %173 = arith.addf %171, %172 : vector<8x32xf32>
    %174 = arith.negf %173 : vector<8x32xf32>
    %175 = math.exp %174 : vector<8x32xf32>
    %cst_50 = arith.constant 1.000000e+00 : f32
    %176 = vector.broadcast %cst_50 : f32 to vector<8x32xf32>
    %177 = arith.addf %176, %175 : vector<8x32xf32>
    %178 = arith.divf %176, %177 : vector<8x32xf32>
    %179 = vector.extract_strided_slice %160 {offsets = [0, 64], sizes = [8, 32], strides = [1, 1]} : vector<8x96xf32> to vector<8x32xf32>
    %180 = vector.extract_strided_slice %162 {offsets = [0, 64], sizes = [8, 32], strides = [1, 1]} : vector<8x96xf32> to vector<8x32xf32>
    %181 = arith.addf %180, %12 : vector<8x32xf32>
    %182 = arith.mulf %170, %181 : vector<8x32xf32>
    %183 = arith.addf %179, %182 : vector<8x32xf32>
    %184 = math.tanh %183 : vector<8x32xf32>
    %cst_51 = arith.constant 1.000000e+00 : f32
    %185 = vector.broadcast %cst_51 : f32 to vector<8x32xf32>
    %186 = arith.subf %185, %178 : vector<8x32xf32>
    %187 = arith.mulf %186, %184 : vector<8x32xf32>
    %188 = arith.mulf %178, %153 : vector<8x32xf32>
    %189 = arith.addf %187, %188 : vector<8x32xf32>
    %190 = arith.index_cast %c4_i32 : i32 to index
    %c0_52 = arith.constant 0 : index
    %c0_53 = arith.constant 0 : index
    %191 = vector.load %arg13[%190, %c0_52, %c0_53] : memref<8x8x32xf32, #tpu.memory_space<vmem>>, vector<1x8x32xf32>
    %192 = vector.shape_cast %191 : vector<1x8x32xf32> to vector<8x32xf32>
    %193 = vector.shape_cast %189 : vector<8x32xf32> to vector<1x8x32xf32>
    tpu.vector_store %arg13[%190, %c0_52, %c0_53], %193 {strides = array<i32>} : memref<8x8x32xf32, #tpu.memory_space<vmem>>, vector<1x8x32xf32>,
    %c5_i32 = arith.constant 5 : i32
    %194 = arith.index_cast %c5_i32 : i32 to index
    %c0_54 = arith.constant 0 : index
    %c0_55 = arith.constant 0 : index
    %195 = vector.load %arg12[%194, %c0_54, %c0_55] : memref<8x8x96xf32, #tpu.memory_space<vmem>>, vector<1x8x96xf32>
    %196 = vector.shape_cast %195 : vector<1x8x96xf32> to vector<8x96xf32>
    %197 = arith.truncf %189 : vector<8x32xf32> to vector<8x32xbf16>
    %cst_56 = arith.constant dense<0.000000e+00> : vector<8x96xf32>
    %198 = tpu.matmul %197, %9, %cst_56 {dimension_numbers = #tpu.dot_dimension_numbers<[1], [0], [0], [1], [0, 0, 1, 1], [], []>} : vector<8x32xbf16>, vector<32x96xbf16>, vector<8x96xf32> -> vector<8x96xf32>
    %199 = vector.extract_strided_slice %196 {offsets = [0, 0], sizes = [8, 32], strides = [1, 1]} : vector<8x96xf32> to vector<8x32xf32>
    %200 = vector.extract_strided_slice %198 {offsets = [0, 0], sizes = [8, 32], strides = [1, 1]} : vector<8x96xf32> to vector<8x32xf32>
    %201 = arith.addf %199, %200 : vector<8x32xf32>
    %202 = arith.negf %201 : vector<8x32xf32>
    %203 = math.exp %202 : vector<8x32xf32>
    %cst_57 = arith.constant 1.000000e+00 : f32
    %204 = vector.broadcast %cst_57 : f32 to vector<8x32xf32>
    %205 = arith.addf %204, %203 : vector<8x32xf32>
    %206 = arith.divf %204, %205 : vector<8x32xf32>
    %207 = vector.extract_strided_slice %196 {offsets = [0, 32], sizes = [8, 32], strides = [1, 1]} : vector<8x96xf32> to vector<8x32xf32>
    %208 = vector.extract_strided_slice %198 {offsets = [0, 32], sizes = [8, 32], strides = [1, 1]} : vector<8x96xf32> to vector<8x32xf32>
    %209 = arith.addf %207, %208 : vector<8x32xf32>
    %210 = arith.negf %209 : vector<8x32xf32>
    %211 = math.exp %210 : vector<8x32xf32>
    %cst_58 = arith.constant 1.000000e+00 : f32
    %212 = vector.broadcast %cst_58 : f32 to vector<8x32xf32>
    %213 = arith.addf %212, %211 : vector<8x32xf32>
    %214 = arith.divf %212, %213 : vector<8x32xf32>
    %215 = vector.extract_strided_slice %196 {offsets = [0, 64], sizes = [8, 32], strides = [1, 1]} : vector<8x96xf32> to vector<8x32xf32>
    %216 = vector.extract_strided_slice %198 {offsets = [0, 64], sizes = [8, 32], strides = [1, 1]} : vector<8x96xf32> to vector<8x32xf32>
    %217 = arith.addf %216, %12 : vector<8x32xf32>
    %218 = arith.mulf %206, %217 : vector<8x32xf32>
    %219 = arith.addf %215, %218 : vector<8x32xf32>
    %220 = math.tanh %219 : vector<8x32xf32>
    %cst_59 = arith.constant 1.000000e+00 : f32
    %221 = vector.broadcast %cst_59 : f32 to vector<8x32xf32>
    %222 = arith.subf %221, %214 : vector<8x32xf32>
    %223 = arith.mulf %222, %220 : vector<8x32xf32>
    %224 = arith.mulf %214, %189 : vector<8x32xf32>
    %225 = arith.addf %223, %224 : vector<8x32xf32>
    %226 = arith.index_cast %c5_i32 : i32 to index
    %c0_60 = arith.constant 0 : index
    %c0_61 = arith.constant 0 : index
    %227 = vector.load %arg13[%226, %c0_60, %c0_61] : memref<8x8x32xf32, #tpu.memory_space<vmem>>, vector<1x8x32xf32>
    %228 = vector.shape_cast %227 : vector<1x8x32xf32> to vector<8x32xf32>
    %229 = vector.shape_cast %225 : vector<8x32xf32> to vector<1x8x32xf32>
    tpu.vector_store %arg13[%226, %c0_60, %c0_61], %229 {strides = array<i32>} : memref<8x8x32xf32, #tpu.memory_space<vmem>>, vector<1x8x32xf32>,
    %c6_i32 = arith.constant 6 : i32
    %230 = arith.index_cast %c6_i32 : i32 to index
    %c0_62 = arith.constant 0 : index
    %c0_63 = arith.constant 0 : index
    %231 = vector.load %arg12[%230, %c0_62, %c0_63] : memref<8x8x96xf32, #tpu.memory_space<vmem>>, vector<1x8x96xf32>
    %232 = vector.shape_cast %231 : vector<1x8x96xf32> to vector<8x96xf32>
    %233 = arith.truncf %225 : vector<8x32xf32> to vector<8x32xbf16>
    %cst_64 = arith.constant dense<0.000000e+00> : vector<8x96xf32>
    %234 = tpu.matmul %233, %9, %cst_64 {dimension_numbers = #tpu.dot_dimension_numbers<[1], [0], [0], [1], [0, 0, 1, 1], [], []>} : vector<8x32xbf16>, vector<32x96xbf16>, vector<8x96xf32> -> vector<8x96xf32>
    %235 = vector.extract_strided_slice %232 {offsets = [0, 0], sizes = [8, 32], strides = [1, 1]} : vector<8x96xf32> to vector<8x32xf32>
    %236 = vector.extract_strided_slice %234 {offsets = [0, 0], sizes = [8, 32], strides = [1, 1]} : vector<8x96xf32> to vector<8x32xf32>
    %237 = arith.addf %235, %236 : vector<8x32xf32>
    %238 = arith.negf %237 : vector<8x32xf32>
    %239 = math.exp %238 : vector<8x32xf32>
    %cst_65 = arith.constant 1.000000e+00 : f32
    %240 = vector.broadcast %cst_65 : f32 to vector<8x32xf32>
    %241 = arith.addf %240, %239 : vector<8x32xf32>
    %242 = arith.divf %240, %241 : vector<8x32xf32>
    %243 = vector.extract_strided_slice %232 {offsets = [0, 32], sizes = [8, 32], strides = [1, 1]} : vector<8x96xf32> to vector<8x32xf32>
    %244 = vector.extract_strided_slice %234 {offsets = [0, 32], sizes = [8, 32], strides = [1, 1]} : vector<8x96xf32> to vector<8x32xf32>
    %245 = arith.addf %243, %244 : vector<8x32xf32>
    %246 = arith.negf %245 : vector<8x32xf32>
    %247 = math.exp %246 : vector<8x32xf32>
    %cst_66 = arith.constant 1.000000e+00 : f32
    %248 = vector.broadcast %cst_66 : f32 to vector<8x32xf32>
    %249 = arith.addf %248, %247 : vector<8x32xf32>
    %250 = arith.divf %248, %249 : vector<8x32xf32>
    %251 = vector.extract_strided_slice %232 {offsets = [0, 64], sizes = [8, 32], strides = [1, 1]} : vector<8x96xf32> to vector<8x32xf32>
    %252 = vector.extract_strided_slice %234 {offsets = [0, 64], sizes = [8, 32], strides = [1, 1]} : vector<8x96xf32> to vector<8x32xf32>
    %253 = arith.addf %252, %12 : vector<8x32xf32>
    %254 = arith.mulf %242, %253 : vector<8x32xf32>
    %255 = arith.addf %251, %254 : vector<8x32xf32>
    %256 = math.tanh %255 : vector<8x32xf32>
    %cst_67 = arith.constant 1.000000e+00 : f32
    %257 = vector.broadcast %cst_67 : f32 to vector<8x32xf32>
    %258 = arith.subf %257, %250 : vector<8x32xf32>
    %259 = arith.mulf %258, %256 : vector<8x32xf32>
    %260 = arith.mulf %250, %225 : vector<8x32xf32>
    %261 = arith.addf %259, %260 : vector<8x32xf32>
    %262 = arith.index_cast %c6_i32 : i32 to index
    %c0_68 = arith.constant 0 : index
    %c0_69 = arith.constant 0 : index
    %263 = vector.load %arg13[%262, %c0_68, %c0_69] : memref<8x8x32xf32, #tpu.memory_space<vmem>>, vector<1x8x32xf32>
    %264 = vector.shape_cast %263 : vector<1x8x32xf32> to vector<8x32xf32>
    %265 = vector.shape_cast %261 : vector<8x32xf32> to vector<1x8x32xf32>
    tpu.vector_store %arg13[%262, %c0_68, %c0_69], %265 {strides = array<i32>} : memref<8x8x32xf32, #tpu.memory_space<vmem>>, vector<1x8x32xf32>,
    %c7_i32 = arith.constant 7 : i32
    %266 = arith.index_cast %c7_i32 : i32 to index
    %c0_70 = arith.constant 0 : index
    %c0_71 = arith.constant 0 : index
    %267 = vector.load %arg12[%266, %c0_70, %c0_71] : memref<8x8x96xf32, #tpu.memory_space<vmem>>, vector<1x8x96xf32>
    %268 = vector.shape_cast %267 : vector<1x8x96xf32> to vector<8x96xf32>
    %269 = arith.truncf %261 : vector<8x32xf32> to vector<8x32xbf16>
    %cst_72 = arith.constant dense<0.000000e+00> : vector<8x96xf32>
    %270 = tpu.matmul %269, %9, %cst_72 {dimension_numbers = #tpu.dot_dimension_numbers<[1], [0], [0], [1], [0, 0, 1, 1], [], []>} : vector<8x32xbf16>, vector<32x96xbf16>, vector<8x96xf32> -> vector<8x96xf32>
    %271 = vector.extract_strided_slice %268 {offsets = [0, 0], sizes = [8, 32], strides = [1, 1]} : vector<8x96xf32> to vector<8x32xf32>
    %272 = vector.extract_strided_slice %270 {offsets = [0, 0], sizes = [8, 32], strides = [1, 1]} : vector<8x96xf32> to vector<8x32xf32>
    %273 = arith.addf %271, %272 : vector<8x32xf32>
    %274 = arith.negf %273 : vector<8x32xf32>
    %275 = math.exp %274 : vector<8x32xf32>
    %cst_73 = arith.constant 1.000000e+00 : f32
    %276 = vector.broadcast %cst_73 : f32 to vector<8x32xf32>
    %277 = arith.addf %276, %275 : vector<8x32xf32>
    %278 = arith.divf %276, %277 : vector<8x32xf32>
    %279 = vector.extract_strided_slice %268 {offsets = [0, 32], sizes = [8, 32], strides = [1, 1]} : vector<8x96xf32> to vector<8x32xf32>
    %280 = vector.extract_strided_slice %270 {offsets = [0, 32], sizes = [8, 32], strides = [1, 1]} : vector<8x96xf32> to vector<8x32xf32>
    %281 = arith.addf %279, %280 : vector<8x32xf32>
    %282 = arith.negf %281 : vector<8x32xf32>
    %283 = math.exp %282 : vector<8x32xf32>
    %cst_74 = arith.constant 1.000000e+00 : f32
    %284 = vector.broadcast %cst_74 : f32 to vector<8x32xf32>
    %285 = arith.addf %284, %283 : vector<8x32xf32>
    %286 = arith.divf %284, %285 : vector<8x32xf32>
    %287 = vector.extract_strided_slice %268 {offsets = [0, 64], sizes = [8, 32], strides = [1, 1]} : vector<8x96xf32> to vector<8x32xf32>
    %288 = vector.extract_strided_slice %270 {offsets = [0, 64], sizes = [8, 32], strides = [1, 1]} : vector<8x96xf32> to vector<8x32xf32>
    %289 = arith.addf %288, %12 : vector<8x32xf32>
    %290 = arith.mulf %278, %289 : vector<8x32xf32>
    %291 = arith.addf %287, %290 : vector<8x32xf32>
    %292 = math.tanh %291 : vector<8x32xf32>
    %cst_75 = arith.constant 1.000000e+00 : f32
    %293 = vector.broadcast %cst_75 : f32 to vector<8x32xf32>
    %294 = arith.subf %293, %286 : vector<8x32xf32>
    %295 = arith.mulf %294, %292 : vector<8x32xf32>
    %296 = arith.mulf %286, %261 : vector<8x32xf32>
    %297 = arith.addf %295, %296 : vector<8x32xf32>
    %298 = arith.index_cast %c7_i32 : i32 to index
    %c0_76 = arith.constant 0 : index
    %c0_77 = arith.constant 0 : index
    %299 = vector.load %arg13[%298, %c0_76, %c0_77] : memref<8x8x32xf32, #tpu.memory_space<vmem>>, vector<1x8x32xf32>
    %300 = vector.shape_cast %299 : vector<1x8x32xf32> to vector<8x32xf32>
    %301 = vector.shape_cast %297 : vector<8x32xf32> to vector<1x8x32xf32>
    tpu.vector_store %arg13[%298, %c0_76, %c0_77], %301 {strides = array<i32>} : memref<8x8x32xf32, #tpu.memory_space<vmem>>, vector<1x8x32xf32>,
    %c8_i32 = arith.constant 8 : i32
    %c0_78 = arith.constant 0 : index
    %c0_79 = arith.constant 0 : index
    %c0_80 = arith.constant 0 : index
    %302 = vector.load %arg13[%c0_78, %c0_79, %c0_80] : memref<8x8x32xf32, #tpu.memory_space<vmem>>, vector<8x8x32xf32>
    %303 = vector.shape_cast %302 : vector<8x8x32xf32> to vector<64x32xf32>
    %304 = arith.truncf %303 : vector<64x32xf32> to vector<64x32xbf16>
    %c0_81 = arith.constant 0 : index
    %c0_82 = arith.constant 0 : index
    %305 = vector.load %arg6[%c0_81, %c0_82] : memref<32x96xbf16, #tpu.memory_space<vmem>>, vector<32x96xbf16>
    %cst_83 = arith.constant dense<0.000000e+00> : vector<64x96xf32>
    %306 = tpu.matmul %304, %305, %cst_83 {dimension_numbers = #tpu.dot_dimension_numbers<[1], [0], [0], [1], [0, 0, 1, 1], [], []>} : vector<64x32xbf16>, vector<32x96xbf16>, vector<64x96xf32> -> vector<64x96xf32>
    %c0_84 = arith.constant 0 : index
    %c0_85 = arith.constant 0 : index
    %307 = vector.load %arg7[%c0_84, %c0_85] : memref<1x96xf32, #tpu.memory_space<vmem>>, vector<1x96xf32>
    %308 = vector.broadcast %307 : vector<1x96xf32> to vector<64x96xf32>
    %309 = arith.addf %306, %308 : vector<64x96xf32>
    %310 = vector.shape_cast %309 : vector<64x96xf32> to vector<8x8x96xf32>
    %c0_86 = arith.constant 0 : index
    %c0_87 = arith.constant 0 : index
    %c0_88 = arith.constant 0 : index
    %311 = vector.load %arg14[%c0_86, %c0_87, %c0_88] : memref<8x8x96xf32, #tpu.memory_space<vmem>>, vector<8x8x96xf32>
    tpu.vector_store %arg14[%c0_86, %c0_87, %c0_88], %310 {strides = array<i32>} : memref<8x8x96xf32, #tpu.memory_space<vmem>>, vector<8x8x96xf32>,
    %c0_89 = arith.constant 0 : index
    %c0_90 = arith.constant 0 : index
    %312 = vector.load %arg10[%c0_89, %c0_90] : memref<64x64xf32, #tpu.memory_space<vmem>>, vector<64x64xf32>
    %c0_91 = arith.constant 0 : index
    %c0_92 = arith.constant 0 : index
    %c0_93 = arith.constant 0 : index
    %313 = vector.load %arg14[%c0_91, %c0_92, %c0_93] : memref<8x8x96xf32, #tpu.memory_space<vmem>>, vector<8x8x96xf32>
    %314 = vector.shape_cast %313 : vector<8x8x96xf32> to vector<64x96xf32>
    %315 = vector.extract_strided_slice %314 {offsets = [0, 0], sizes = [64, 32], strides = [1, 1]} : vector<64x96xf32> to vector<64x32xf32>
    %316 = arith.truncf %315 : vector<64x32xf32> to vector<64x32xbf16>
    %317 = vector.extract_strided_slice %314 {offsets = [0, 32], sizes = [64, 32], strides = [1, 1]} : vector<64x96xf32> to vector<64x32xf32>
    %318 = arith.truncf %317 : vector<64x32xf32> to vector<64x32xbf16>
    %319 = vector.extract_strided_slice %314 {offsets = [0, 64], sizes = [64, 32], strides = [1, 1]} : vector<64x96xf32> to vector<64x32xf32>
    %320 = arith.truncf %319 : vector<64x32xf32> to vector<64x32xbf16>
    %cst_94 = arith.constant dense<0.000000e+00> : vector<64x64xf32>
    %321 = tpu.matmul %316, %318, %cst_94 {dimension_numbers = #tpu.dot_dimension_numbers<[1], [1], [0], [0], [0, 0, 1, 0], [], []>} : vector<64x32xbf16>, vector<64x32xbf16>, vector<64x64xf32> -> vector<64x64xf32>
    %cst_95 = arith.constant 0.176776692 : f32
    %322 = vector.broadcast %cst_95 : f32 to vector<64x64xf32>
    %323 = arith.mulf %321, %322 : vector<64x64xf32>
    %324 = arith.addf %323, %312 : vector<64x64xf32>
    %cst_96 = arith.constant dense<0xFF800000> : vector<64xf32>
    %325 = vector.multi_reduction <maximumf>, %324, %cst_96 [1] : vector<64x64xf32> to vector<64xf32>
    %326 = vector.shape_cast %325 : vector<64xf32> to vector<64x1xf32>
    %327 = vector.broadcast %326 : vector<64x1xf32> to vector<64x64xf32>
    %328 = arith.subf %324, %327 : vector<64x64xf32>
    %329 = math.exp %328 : vector<64x64xf32>
    %cst_97 = arith.constant dense<0.000000e+00> : vector<64xf32>
    %330 = vector.multi_reduction <add>, %329, %cst_97 [1] : vector<64x64xf32> to vector<64xf32>
    %331 = vector.shape_cast %330 : vector<64xf32> to vector<64x1xf32>
    %332 = tpu.reciprocal %331 {approx = true} : vector<64x1xf32> -> vector<64x1xf32>
    %333 = vector.broadcast %332 : vector<64x1xf32> to vector<64x64xf32>
    %334 = arith.mulf %329, %333 : vector<64x64xf32>
    %335 = arith.truncf %334 : vector<64x64xf32> to vector<64x64xbf16>
    %cst_98 = arith.constant dense<0.000000e+00> : vector<64x32xf32>
    %336 = tpu.matmul %335, %320, %cst_98 {dimension_numbers = #tpu.dot_dimension_numbers<[1], [0], [0], [1], [0, 0, 1, 1], [], []>} : vector<64x64xbf16>, vector<64x32xbf16>, vector<64x32xf32> -> vector<64x32xf32>
    %c0_99 = arith.constant 0 : index
    %c0_100 = arith.constant 0 : index
    %c0_101 = arith.constant 0 : index
    %337 = vector.load %arg13[%c0_99, %c0_100, %c0_101] : memref<8x8x32xf32, #tpu.memory_space<vmem>>, vector<8x8x32xf32>
    %338 = vector.shape_cast %337 : vector<8x8x32xf32> to vector<64x32xf32>
    %339 = arith.mulf %336, %338 : vector<64x32xf32>
    %340 = vector.shape_cast %339 : vector<64x32xf32> to vector<8x8x32xf32>
    %cst_102 = arith.constant dense<0.000000e+00> : vector<8x32xf32>
    %341 = vector.multi_reduction <add>, %340, %cst_102 [0] : vector<8x8x32xf32> to vector<8x32xf32>
    %342 = arith.truncf %341 : vector<8x32xf32> to vector<8x32xbf16>
    %c0_103 = arith.constant 0 : index
    %c0_104 = arith.constant 0 : index
    %343 = vector.load %arg8[%c0_103, %c0_104] : memref<32x128xbf16, #tpu.memory_space<vmem>>, vector<32x128xbf16>
    %cst_105 = arith.constant dense<0.000000e+00> : vector<8x128xf32>
    %344 = tpu.matmul %342, %343, %cst_105 {dimension_numbers = #tpu.dot_dimension_numbers<[1], [0], [0], [1], [0, 0, 1, 1], [], []>} : vector<8x32xbf16>, vector<32x128xbf16>, vector<8x128xf32> -> vector<8x128xf32>
    %c0_106 = arith.constant 0 : index
    %c0_107 = arith.constant 0 : index
    %345 = vector.load %arg9[%c0_106, %c0_107] : memref<1x128xf32, #tpu.memory_space<vmem>>, vector<1x128xf32>
    %346 = vector.broadcast %345 : vector<1x128xf32> to vector<8x128xf32>
    %347 = arith.addf %344, %346 : vector<8x128xf32>
    %348 = math.tanh %347 : vector<8x128xf32>
    %c0_108 = arith.constant 0 : index
    %c0_109 = arith.constant 0 : index
    %349 = vector.load %arg11[%c0_108, %c0_109] : memref<8x128xf32, #tpu.memory_space<vmem>>, vector<8x128xf32>
    tpu.vector_store %arg11[%c0_108, %c0_109], %348 {strides = array<i32>} : memref<8x128xf32, #tpu.memory_space<vmem>>, vector<8x128xf32>,
    return
  }
  func.func @transform_0(%arg0: i32) -> (i32, i32, i32) {
    %c0_i32 = arith.constant 0 : i32
    %c0_i32_0 = arith.constant 0 : i32
    %c0_i32_1 = arith.constant 0 : i32
    return %c0_i32, %arg0, %c0_i32_0 : i32, i32, i32
  }
  func.func @transform_1(%arg0: i32) -> (i32, i32) {
    %c0_i32 = arith.constant 0 : i32
    %c0_i32_0 = arith.constant 0 : i32
    %c0_i32_1 = arith.constant 0 : i32
    return %c0_i32, %c0_i32_0 : i32, i32
  }
  func.func @transform_2(%arg0: i32) -> (i32, i32) {
    %c0_i32 = arith.constant 0 : i32
    %c0_i32_0 = arith.constant 0 : i32
    %c0_i32_1 = arith.constant 0 : i32
    return %c0_i32, %c0_i32_0 : i32, i32
  }
  func.func @transform_3(%arg0: i32) -> (i32, i32) {
    %c0_i32 = arith.constant 0 : i32
    %c0_i32_0 = arith.constant 0 : i32
    %c0_i32_1 = arith.constant 0 : i32
    return %c0_i32, %c0_i32_0 : i32, i32
  }
  func.func @transform_4(%arg0: i32) -> (i32, i32) {
    %c0_i32 = arith.constant 0 : i32
    %c0_i32_0 = arith.constant 0 : i32
    %c0_i32_1 = arith.constant 0 : i32
    return %c0_i32, %c0_i32_0 : i32, i32
  }
  func.func @transform_5(%arg0: i32) -> (i32, i32) {
    %c0_i32 = arith.constant 0 : i32
    %c0_i32_0 = arith.constant 0 : i32
    %c0_i32_1 = arith.constant 0 : i32
    return %c0_i32, %c0_i32_0 : i32, i32
  }
  func.func @transform_6(%arg0: i32) -> (i32, i32) {
    %c0_i32 = arith.constant 0 : i32
    %c0_i32_0 = arith.constant 0 : i32
    %c0_i32_1 = arith.constant 0 : i32
    return %c0_i32, %c0_i32_0 : i32, i32
  }
  func.func @transform_7(%arg0: i32) -> (i32, i32) {
    %c0_i32 = arith.constant 0 : i32
    %c0_i32_0 = arith.constant 0 : i32
    %c0_i32_1 = arith.constant 0 : i32
    return %c0_i32, %c0_i32_0 : i32, i32
  }
  func.func @transform_8(%arg0: i32) -> (i32, i32) {
    %c0_i32 = arith.constant 0 : i32
    %c0_i32_0 = arith.constant 0 : i32
    %c0_i32_1 = arith.constant 0 : i32
    return %c0_i32, %c0_i32_0 : i32, i32
  }
  func.func @transform_9(%arg0: i32) -> (i32, i32) {
    %c0_i32 = arith.constant 0 : i32
    %c0_i32_0 = arith.constant 0 : i32
    %c0_i32_1 = arith.constant 0 : i32
    return %c0_i32, %c0_i32_0 : i32, i32
  }
  func.func @transform_10(%arg0: i32) -> (i32, i32) {
    %c0_i32 = arith.constant 0 : i32
    %c0_i32_0 = arith.constant 0 : i32
    return %arg0, %c0_i32 : i32, i32
  }
}

</mosaic_0001>

<llo_original>
// kernel: tpu_custom_call.1
$region0: #{tpu_custom_call.1}
  #allocation0 [shape = 'u32[]', space=smem, size = 0x4, offset = 0x4, fixed_abs, tag = 'smem constant byte address 0x4 - core index']
  #allocation1 [shape = 'u32[144,128]{1,0:T(1,128)}', space=vmem, size = 0x12000, scoped, tag = 'internal scratch']
  #allocation2 [shape = 'f32[8,8,96]{2,1,0:T(8,128)}', space=vmem, size = 0x8000, scoped, tag = 'scratch operand']
  #allocation3 [shape = 'f32[8,8,32]{2,1,0:T(8,128)}', space=vmem, size = 0x8000, scoped, tag = 'scratch operand']
  #allocation4 [shape = 'f32[8,8,96]{2,1,0:T(8,128)}', space=vmem, size = 0x8000, scoped, tag = 'scratch operand']
  %s0 = inlined_call_operand.vmem [shape: bf16[8,16,8], index: 0, kind: input, shape index: {}]
  %s1 = inlined_call_operand.hbm [shape: bf16[8,96], index: 1, kind: input, shape index: {}]
  %s2 = inlined_call_operand.vmem [shape: bf16[32,96], index: 2, kind: input, shape index: {}]
  %s3 = inlined_call_operand.hbm [shape: f32[1,96], index: 3, kind: input, shape index: {}]
  %s4 = inlined_call_operand.hbm [shape: f32[1,32], index: 4, kind: input, shape index: {}]
  %s5 = inlined_call_operand.vmem [shape: bf16[32,96], index: 5, kind: input, shape index: {}]
  %s6 = inlined_call_operand.hbm [shape: f32[1,96], index: 6, kind: input, shape index: {}]
  %s7 = inlined_call_operand.vmem [shape: bf16[32,128], index: 7, kind: input, shape index: {}]
  %s8 = inlined_call_operand.hbm [shape: f32[1,128], index: 8, kind: input, shape index: {}]
  %s9 = inlined_call_operand.vmem [shape: f32[64,64], index: 9, kind: input, shape index: {}]
  %s10 = inlined_call_operand.hbm [shape: f32[16,128], index: 10, kind: output, shape index: {}]
  %s11 = sld [smem:[#allocation0]]
  $region134: #{tpu_custom_call.1} parent=0
    _
  %s13 = ssub.s32 1, %s11
  %s14 = scalar_select 0, %s13, %s11
  $region1: #{tpu_custom_call.1} parent=0
    #allocation5 [shape = 'u8[32768]{0}', space=vmem, size = 0x8000, scoped, tag = 'input window, operand 0']
    #allocation6 [shape = 'u8[2048]{0}', space=vmem, size = 0x800, scoped, tag = 'input window, operand 1, single buffered']
    #allocation7 [shape = 's32[2]{0}', space=sflag, size = 0x8, scoped, tag = 'scoped memory for tpu_custom_call.1']
    #allocation8 [shape = 's32[2]{0}', space=sflag, size = 0x8, scoped, tag = 'scoped memory for tpu_custom_call.1']
    #allocation9 [shape = 'u8[512]{0}', space=vmem, size = 0x400, scoped, tag = 'input window, operand 3, single buffered']
    #allocation10 [shape = 's32[1]{0}', space=sflag, size = 0x4, scoped, tag = 'scoped memory for tpu_custom_call.1']
    #allocation11 [shape = 'u8[512]{0}', space=vmem, size = 0x400, scoped, tag = 'input window, operand 4, single buffered']
    #allocation12 [shape = 'u8[512]{0}', space=vmem, size = 0x400, scoped, tag = 'input window, operand 6, single buffered']
    #allocation13 [shape = 's32[1]{0}', space=sflag, size = 0x4, scoped, tag = 'scoped memory for tpu_custom_call.1']
    #allocation14 [shape = 'u8[512]{0}', space=vmem, size = 0x400, scoped, tag = 'input window, operand 8, single buffered']
    #allocation15 [shape = 'u8[8192]{0}', space=vmem, size = 0x2000, scoped, tag = 'output window, operand 0']
    %15 = vsyncpa [#allocation7], 0
    %16 = vsyncpa [#allocation10], 0
    %17 = vsyncpa [#allocation13], 0
    %18 = vsyncpa [#allocation8], 0
    %s19 = scalar_lea.sflag [#allocation8], 1
    %20 = vsyncpa %s19, 0
    loop: start=0, step=1, limit=4
    $region2: #{tpu_custom_call.1} parent=1 // loop_pre_header
      _
    $region3: #{tpu_custom_call.1} parent=1 // loop_header
      %s22 = sphi 0, %s26
      %p23 = scmp.ge.s32.totalorder %s22, 4
      %s32 = sphi 0, %s34
      %s35 = sphi 0, %s32
      %s36 = sphi 0, %s35
      %s52 = sphi 0, %s36
      %s56 = sphi 0, %s56
      %s58 = sphi 0, %s56
      %s59 = sphi 0, %s58
      %s73 = sphi 0, %s59
      %s77 = sphi 0, %s77
      %s79 = sphi 0, %s77
      %s80 = sphi 0, %s79
      %s94 = sphi 0, %s80
      %s98 = sphi 0, %s98
      %s100 = sphi 0, %s98
      %s101 = sphi 0, %s100
      %s115 = sphi 0, %s101
      %s119 = sphi 0, %s119
      %s121 = sphi 0, %s119
      %s122 = sphi 0, %s121
      %s136 = sphi 0, %s122
      %s140 = sphi 0, %s140
      %s142 = sphi 0, %s140
      %s143 = sphi 0, %s142
      %s157 = sphi 0, %s143
      %s161 = sphi 0, %s161
      %s163 = sphi 0, %s161
      %s164 = sphi 0, %s163
      %s178 = sphi 0, %s164
      %s182 = sphi 0, %s182
      %s184 = sphi 0, %s182
      %s185 = sphi 0, %s184
      %s199 = sphi 0, %s185
      %s203 = sphi 0, %s203
      %s205 = sphi 0, %s203
      %s206 = sphi 0, %s205
      %s220 = sphi 0, %s206
      %s224 = sphi 0, %s224
      %s226 = sphi 0, %s224
      %s227 = sphi 0, %s226
      %s241 = sphi 0, %s227
      %s247 = sphi 0, %s249
      %s250 = sphi 0, %s247
      %s251 = sphi 0, %s250
      %s267 = sphi 0, %s251
    $region4: #{tpu_custom_call.1} parent=1 // loop_header_branch
      %25 = sbr.rel (%p23) target = $region8
    $region5: #{tpu_custom_call.1} parent=1 // loop_body
      %s27 = ssub.s32 %s22, 1
      %s28 = ssub.s32 %s22, 2
      %s29 = sadd.s32 %s22, 1
      %s30 = ssub.s32 %s22, %s29
      %p31 = scmp.eq.s32.totalorder %s30, 0
      %s33 = sadd.s32 %s32, 1
      %s34 = scalar_select %p31, %s32, %s33
      %p37 = pneg %p31
      %p38 = scmp.eq.s32.totalorder %s22, 1
      %p39 = por %p37, %p38
      %p40 = scmp.ne.s32.totalorder %s32, %s35
      %p41 = scmp.eq.s32.totalorder %s22, 0
      %p42 = por %p40, %p41
      %p43 = scmp.ne.s32.totalorder %s32, %s35
      %p44 = scmp.eq.s32.totalorder %s27, 1
      %p45 = por %p43, %p44
      %p46 = scmp.ne.s32.totalorder %s35, %s36
      %p47 = scmp.eq.s32.totalorder %s27, 0
      %p48 = por %p46, %p47
      %p49 = scmp.ne.s32.totalorder %s35, %s36
      %p50 = scmp.eq.s32.totalorder %s28, 1
      %p51 = por %p49, %p50
      %p53 = scmp.ne.s32.totalorder %s36, %s52
      %p54 = scmp.eq.s32.totalorder %s28, 0
      %p55 = por %p53, %p54
      %s57 = sadd.s32 %s56, 1
      %p60 = scmp.eq.s32.totalorder %s22, 1
      %p61 = scmp.ne.s32.totalorder %s56, %s58
      %p62 = scmp.eq.s32.totalorder %s22, 0
      %p63 = por %p61, %p62
      %p64 = scmp.ne.s32.totalorder %s56, %s58
      %p65 = scmp.eq.s32.totalorder %s27, 1
      %p66 = por %p64, %p65
      %p67 = scmp.ne.s32.totalorder %s58, %s59
      %p68 = scmp.eq.s32.totalorder %s27, 0
      %p69 = por %p67, %p68
      %p70 = scmp.ne.s32.totalorder %s58, %s59
      %p71 = scmp.eq.s32.totalorder %s28, 1
      %p72 = por %p70, %p71
      %p74 = scmp.ne.s32.totalorder %s59, %s73
      %p75 = scmp.eq.s32.totalorder %s28, 0
      %p76 = por %p74, %p75
      %s78 = sadd.s32 %s77, 1
      %p81 = scmp.eq.s32.totalorder %s22, 1
      %p82 = scmp.ne.s32.totalorder %s77, %s79
      %p83 = scmp.eq.s32.totalorder %s22, 0
      %p84 = por %p82, %p83
      %p85 = scmp.ne.s32.totalorder %s77, %s79
      %p86 = scmp.eq.s32.totalorder %s27, 1
      %p87 = por %p85, %p86
      %p88 = scmp.ne.s32.totalorder %s79, %s80
      %p89 = scmp.eq.s32.totalorder %s27, 0
      %p90 = por %p88, %p89
      %p91 = scmp.ne.s32.totalorder %s79, %s80
      %p92 = scmp.eq.s32.totalorder %s28, 1
      %p93 = por %p91, %p92
      %p95 = scmp.ne.s32.totalorder %s80, %s94
      %p96 = scmp.eq.s32.totalorder %s28, 0
      %p97 = por %p95, %p96
      %s99 = sadd.s32 %s98, 1
      %p102 = scmp.eq.s32.totalorder %s22, 1
      %p103 = scmp.ne.s32.totalorder %s98, %s100
      %p104 = scmp.eq.s32.totalorder %s22, 0
      %p105 = por %p103, %p104
      %p106 = scmp.ne.s32.totalorder %s98, %s100
      %p107 = scmp.eq.s32.totalorder %s27, 1
      %p108 = por %p106, %p107
      %p109 = scmp.ne.s32.totalorder %s100, %s101
      %p110 = scmp.eq.s32.totalorder %s27, 0
      %p111 = por %p109, %p110
      %p112 = scmp.ne.s32.totalorder %s100, %s101
      %p113 = scmp.eq.s32.totalorder %s28, 1
      %p114 = por %p112, %p113
      %p116 = scmp.ne.s32.totalorder %s101, %s115
      %p117 = scmp.eq.s32.totalorder %s28, 0
      %p118 = por %p116, %p117
      %s120 = sadd.s32 %s119, 1
      %p123 = scmp.eq.s32.totalorder %s22, 1
      %p124 = scmp.ne.s32.totalorder %s119, %s121
      %p125 = scmp.eq.s32.totalorder %s22, 0
      %p126 = por %p124, %p125
      %p127 = scmp.ne.s32.totalorder %s119, %s121
      %p128 = scmp.eq.s32.totalorder %s27, 1
      %p129 = por %p127, %p128
      %p130 = scmp.ne.s32.totalorder %s121, %s122
      %p131 = scmp.eq.s32.totalorder %s27, 0
      %p132 = por %p130, %p131
      %p133 = scmp.ne.s32.totalorder %s121, %s122
      %p134 = scmp.eq.s32.totalorder %s28, 1
      %p135 = por %p133, %p134
      %p137 = scmp.ne.s32.totalorder %s122, %s136
      %p138 = scmp.eq.s32.totalorder %s28, 0
      %p139 = por %p137, %p138
      %s141 = sadd.s32 %s140, 1
      %p144 = scmp.eq.s32.totalorder %s22, 1
      %p145 = scmp.ne.s32.totalorder %s140, %s142
      %p146 = scmp.eq.s32.totalorder %s22, 0
      %p147 = por %p145, %p146
      %p148 = scmp.ne.s32.totalorder %s140, %s142
      %p149 = scmp.eq.s32.totalorder %s27, 1
      %p150 = por %p148, %p149
      %p151 = scmp.ne.s32.totalorder %s142, %s143
      %p152 = scmp.eq.s32.totalorder %s27, 0
      %p153 = por %p151, %p152
      %p154 = scmp.ne.s32.totalorder %s142, %s143
      %p155 = scmp.eq.s32.totalorder %s28, 1
      %p156 = por %p154, %p155
      %p158 = scmp.ne.s32.totalorder %s143, %s157
      %p159 = scmp.eq.s32.totalorder %s28, 0
      %p160 = por %p158, %p159
      %s162 = sadd.s32 %s161, 1
      %p165 = scmp.eq.s32.totalorder %s22, 1
      %p166 = scmp.ne.s32.totalorder %s161, %s163
      %p167 = scmp.eq.s32.totalorder %s22, 0
      %p168 = por %p166, %p167
      %p169 = scmp.ne.s32.totalorder %s161, %s163
      %p170 = scmp.eq.s32.totalorder %s27, 1
      %p171 = por %p169, %p170
      %p172 = scmp.ne.s32.totalorder %s163, %s164
      %p173 = scmp.eq.s32.totalorder %s27, 0
      %p174 = por %p172, %p173
      %p175 = scmp.ne.s32.totalorder %s163, %s164
      %p176 = scmp.eq.s32.totalorder %s28, 1
      %p177 = por %p175, %p176
      %p179 = scmp.ne.s32.totalorder %s164, %s178
      %p180 = scmp.eq.s32.totalorder %s28, 0
      %p181 = por %p179, %p180
      %s183 = sadd.s32 %s182, 1
      %p186 = scmp.eq.s32.totalorder %s22, 1
      %p187 = scmp.ne.s32.totalorder %s182, %s184
      %p188 = scmp.eq.s32.totalorder %s22, 0
      %p189 = por %p187, %p188
      %p190 = scmp.ne.s32.totalorder %s182, %s184
      %p191 = scmp.eq.s32.totalorder %s27, 1
      %p192 = por %p190, %p191
      %p193 = scmp.ne.s32.totalorder %s184, %s185
      %p194 = scmp.eq.s32.totalorder %s27, 0
      %p195 = por %p193, %p194
      %p196 = scmp.ne.s32.totalorder %s184, %s185
      %p197 = scmp.eq.s32.totalorder %s28, 1
      %p198 = por %p196, %p197
      %p200 = scmp.ne.s32.totalorder %s185, %s199
      %p201 = scmp.eq.s32.totalorder %s28, 0
      %p202 = por %p200, %p201
      %s204 = sadd.s32 %s203, 1
      %p207 = scmp.eq.s32.totalorder %s22, 1
      %p208 = scmp.ne.s32.totalorder %s203, %s205
      %p209 = scmp.eq.s32.totalorder %s22, 0
      %p210 = por %p208, %p209
      %p211 = scmp.ne.s32.totalorder %s203, %s205
      %p212 = scmp.eq.s32.totalorder %s27, 1
      %p213 = por %p211, %p212
      %p214 = scmp.ne.s32.totalorder %s205, %s206
      %p215 = scmp.eq.s32.totalorder %s27, 0
      %p216 = por %p214, %p215
      %p217 = scmp.ne.s32.totalorder %s205, %s206
      %p218 = scmp.eq.s32.totalorder %s28, 1
      %p219 = por %p217, %p218
      %p221 = scmp.ne.s32.totalorder %s206, %s220
      %p222 = scmp.eq.s32.totalorder %s28, 0
      %p223 = por %p221, %p222
      %s225 = sadd.s32 %s224, 1
      %p228 = scmp.eq.s32.totalorder %s22, 1
      %p229 = scmp.ne.s32.totalorder %s224, %s226
      %p230 = scmp.eq.s32.totalorder %s22, 0
      %p231 = por %p229, %p230
      %p232 = scmp.ne.s32.totalorder %s224, %s226
      %p233 = scmp.eq.s32.totalorder %s27, 1
      %p234 = por %p232, %p233
      %p235 = scmp.ne.s32.totalorder %s226, %s227
      %p236 = scmp.eq.s32.totalorder %s27, 0
      %p237 = por %p235, %p236
      %p238 = scmp.ne.s32.totalorder %s226, %s227
      %p239 = scmp.eq.s32.totalorder %s28, 1
      %p240 = por %p238, %p239
      %p242 = scmp.ne.s32.totalorder %s227, %s241
      %p243 = scmp.eq.s32.totalorder %s28, 0
      %p244 = por %p242, %p243
      %s245 = ssub.s32 %s22, %s29
      %p246 = scmp.eq.s32.totalorder %s245, 0
      %s248 = sadd.s32 %s247, 1
      %s249 = scalar_select %p246, %s247, %s248
      %p252 = pneg %p246
      %p253 = scmp.eq.s32.totalorder %s22, 1
      %p254 = por %p252, %p253
      %p255 = scmp.ne.s32.totalorder %s247, %s250
      %p256 = scmp.eq.s32.totalorder %s22, 0
      %p257 = por %p255, %p256
      %p258 = scmp.ne.s32.totalorder %s247, %s250
      %p259 = scmp.eq.s32.totalorder %s27, 1
      %p260 = por %p258, %p259
      %p261 = scmp.ne.s32.totalorder %s250, %s251
      %p262 = scmp.eq.s32.totalorder %s27, 0
      %p263 = por %p261, %p262
      %p264 = scmp.ne.s32.totalorder %s250, %s251
      %p265 = scmp.eq.s32.totalorder %s28, 1
      %p266 = por %p264, %p265
      %p268 = scmp.ne.s32.totalorder %s251, %s267
      %p269 = scmp.eq.s32.totalorder %s28, 0
      %p270 = por %p268, %p269
      %p271 = scmp.le.s32.totalorder 1, %s22
      %p272 = scmp.lt.s32.totalorder %s22, 3
      %p273 = pnand %p271, %p272
      %p274 = pneg %p273
      // Predicated region
      $region9: #{tpu_custom_call.1} parent=5 // pred_check
        _
      $region10: #{tpu_custom_call.1} parent=5 // pred_check_branch
        %276 = sbr.rel (%p273) target = $region12
      $region11: #{tpu_custom_call.1} parent=5 // pred_region
        %s277 = ssub.s32 %s22, 1
        // Predicated region
        $region13: #{tpu_custom_call.1} parent=11 // pred_check
          %p278 = pneg %p69
        $region14: #{tpu_custom_call.1} parent=11 // pred_check_branch
          %280 = sbr.rel (%p278) target = $region16
        $region15: #{tpu_custom_call.1} parent=11 // pred_region
          %s282 = ssub.s32 64, 64
          %283 = vsyncadd [#allocation7], %s282
          %s285 = sshll.u32 [#allocation6], 4
          %s286 = int_to_ptr.vmem [resolvable:$true] %s285
          %288 = dma.hbm_to_vmem [thread:$0]  %s1, 64, %s286, [#allocation7]
        $region16: #{tpu_custom_call.1} parent=11 // pred_fallthru
          _
        // Predicated region
        $region17: #{tpu_custom_call.1} parent=11 // pred_check
          %p289 = pneg %p90
        $region18: #{tpu_custom_call.1} parent=11 // pred_check_branch
          %291 = sbr.rel (%p289) target = $region20
        $region19: #{tpu_custom_call.1} parent=11 // pred_region
          _
        $region20: #{tpu_custom_call.1} parent=11 // pred_fallthru
          _
        // Predicated region
        $region21: #{tpu_custom_call.1} parent=11 // pred_check
          %p292 = pneg %p111
        $region22: #{tpu_custom_call.1} parent=11 // pred_check_branch
          %294 = sbr.rel (%p292) target = $region24
        $region23: #{tpu_custom_call.1} parent=11 // pred_region
          %s296 = ssub.s32 16, 16
          %297 = vsyncadd [#allocation10], %s296
          %s299 = sshll.u32 [#allocation9], 4
          %s300 = int_to_ptr.vmem [resolvable:$true] %s299
          %302 = dma.hbm_to_vmem [thread:$0]  %s3, 16, %s300, [#allocation10]
        $region24: #{tpu_custom_call.1} parent=11 // pred_fallthru
          _
        // Predicated region
        $region25: #{tpu_custom_call.1} parent=11 // pred_check
          %p303 = pneg %p132
        $region26: #{tpu_custom_call.1} parent=11 // pred_check_branch
          %305 = sbr.rel (%p303) target = $region28
        $region27: #{tpu_custom_call.1} parent=11 // pred_region
          %s307 = ssub.s32 16, 16
          %308 = vsyncadd [#allocation10], %s307
          %s310 = sshll.u32 [#allocation11], 4
          %s311 = int_to_ptr.vmem [resolvable:$true] %s310
          %313 = dma.hbm_to_vmem [thread:$0]  %s4, 16, %s311, [#allocation10]
        $region28: #{tpu_custom_call.1} parent=11 // pred_fallthru
          _
        // Predicated region
        $region29: #{tpu_custom_call.1} parent=11 // pred_check
          %p314 = pneg %p153
        $region30: #{tpu_custom_call.1} parent=11 // pred_check_branch
          %316 = sbr.rel (%p314) target = $region32
        $region31: #{tpu_custom_call.1} parent=11 // pred_region
          _
        $region32: #{tpu_custom_call.1} parent=11 // pred_fallthru
          _
        // Predicated region
        $region33: #{tpu_custom_call.1} parent=11 // pred_check
          %p317 = pneg %p174
        $region34: #{tpu_custom_call.1} parent=11 // pred_check_branch
          %319 = sbr.rel (%p317) target = $region36
        $region35: #{tpu_custom_call.1} parent=11 // pred_region
          %s321 = ssub.s32 16, 16
          %322 = vsyncadd [#allocation13], %s321
          %s324 = sshll.u32 [#allocation12], 4
          %s325 = int_to_ptr.vmem [resolvable:$true] %s324
          %327 = dma.hbm_to_vmem [thread:$0]  %s6, 16, %s325, [#allocation13]
        $region36: #{tpu_custom_call.1} parent=11 // pred_fallthru
          _
        // Predicated region
        $region37: #{tpu_custom_call.1} parent=11 // pred_check
          %p328 = pneg %p195
        $region38: #{tpu_custom_call.1} parent=11 // pred_check_branch
          %330 = sbr.rel (%p328) target = $region40
        $region39: #{tpu_custom_call.1} parent=11 // pred_region
          _
        $region40: #{tpu_custom_call.1} parent=11 // pred_fallthru
          _
        // Predicated region
        $region41: #{tpu_custom_call.1} parent=11 // pred_check
          %p331 = pneg %p216
        $region42: #{tpu_custom_call.1} parent=11 // pred_check_branch
          %333 = sbr.rel (%p331) target = $region44
        $region43: #{tpu_custom_call.1} parent=11 // pred_region
          %s335 = ssub.s32 16, 16
          %336 = vsyncadd [#allocation13], %s335
          %s338 = sshll.u32 [#allocation14], 4
          %s339 = int_to_ptr.vmem [resolvable:$true] %s338
          %341 = dma.hbm_to_vmem [thread:$0]  %s8, 16, %s339, [#allocation13]
        $region44: #{tpu_custom_call.1} parent=11 // pred_fallthru
          _
        // Predicated region
        $region45: #{tpu_custom_call.1} parent=11 // pred_check
          %p342 = pneg %p237
        $region46: #{tpu_custom_call.1} parent=11 // pred_check_branch
          %344 = sbr.rel (%p342) target = $region48
        $region47: #{tpu_custom_call.1} parent=11 // pred_region
          _
        $region48: #{tpu_custom_call.1} parent=11 // pred_fallthru
          _
      $region12: #{tpu_custom_call.1} parent=5 // pred_fallthru
        _
      %p345 = scmp.lt.s32.totalorder %s22, 2
      // Predicated region
      $region49: #{tpu_custom_call.1} parent=5 // pred_check
        %p346 = pneg %p345
      $region50: #{tpu_custom_call.1} parent=5 // pred_check_branch
        %348 = sbr.rel (%p346) target = $region52
      $region51: #{tpu_custom_call.1} parent=5 // pred_region
        // Predicated region
        $region53: #{tpu_custom_call.1} parent=51 // pred_check
          %p349 = pneg %p42
        $region54: #{tpu_custom_call.1} parent=51 // pred_check_branch
          %351 = sbr.rel (%p349) target = $region56
        $region55: #{tpu_custom_call.1} parent=51 // pred_region
          %s352 = sand.u32 %s32, 1
          %s353 = sand.u32 %s32, 1
          %s354 = smul.addr %s353, 32
          %s355 = scalar_lea.vmem [#allocation5], %s354
          %s356 = smul.addr %s22, 4
          %s357 = scalar_lea.vmem %s0, %s356
          // Predicated region
          $region57: #{tpu_custom_call.1} parent=55 // pred_check
            _
          $region58: #{tpu_custom_call.1} parent=55 // pred_check_branch
            %359 = sbr.rel (0) target = $region60
          $region59: #{tpu_custom_call.1} parent=55 // pred_region
            // Predicated region
            $region61: #{tpu_custom_call.1} parent=59 // pred_check
              _
            $region62: #{tpu_custom_call.1} parent=59 // pred_check_branch
              %361 = sbr.rel target = $region64
            $region63: #{tpu_custom_call.1} parent=59 // pred_region
              // Predicated region
              $region76: #{tpu_custom_call.1} parent=63 // pred_check
                _
              $region77: #{tpu_custom_call.1} parent=63 // pred_check_branch
                %391 = sbr.rel (0) target = $region79
              $region78: #{tpu_custom_call.1} parent=63 // pred_region
                loop: start=0, step=1, limit=1
                $region80: #{tpu_custom_call.1} parent=78 // loop_pre_header
                  _
                $region81: #{tpu_custom_call.1} parent=78 // loop_header
                  %s393 = sphi 0, %s397
                  %p394 = scmp.ge.s32.totalorder %s393, 1
                  %s398 = sphi %s357, %s357
                  %s399 = sphi %s355, %s355
                $region82: #{tpu_custom_call.1} parent=78 // loop_header_branch
                  %396 = sbr.rel (%p394) target = $region86
                $region83: #{tpu_custom_call.1} parent=78 // loop_body
                  _
                $region84: #{tpu_custom_call.1} parent=78 // loop_footer
                  %s397 = sadd.s32 1, %s393
                $region85: #{tpu_custom_call.1} parent=78 // loop_footer_branch
                  %392 = sbr.rel target = $region81
                $region86: #{tpu_custom_call.1} parent=78 // loop_exit
                  _
                %s401 = ssub.s32 16, 1
                loop: start=0, step=1, limit=1
                $region87: #{tpu_custom_call.1} parent=78 // loop_pre_header
                  _
                $region88: #{tpu_custom_call.1} parent=78 // loop_header
                  %s403 = sphi 0, %s407
                  %p404 = scmp.ge.s32.totalorder %s403, 1
                  %s408 = sphi %s357, %s357
                  %s409 = sphi %s355, %s355
                $region89: #{tpu_custom_call.1} parent=78 // loop_header_branch
                  %406 = sbr.rel (%p404) target = $region93
                $region90: #{tpu_custom_call.1} parent=78 // loop_body
                  %v410 = vld [vmem:[%s408] sm:%s401]
                  %411 = vst [vmem:[%s409] sm:%s401] %v410
                  %v412 = vld [vmem:[%s408 + $0x8] sm:%s401]
                  %413 = vst [vmem:[%s409 + $0x4] sm:%s401] %v412
                  %v414 = vld [vmem:[%s408 + $0x10] sm:%s401]
                  %415 = vst [vmem:[%s409 + $0x8] sm:%s401] %v414
                  %v416 = vld [vmem:[%s408 + $0x18] sm:%s401]
                  %417 = vst [vmem:[%s409 + $0xc] sm:%s401] %v416
                  %v418 = vld [vmem:[%s408 + $0x20] sm:%s401]
                  %419 = vst [vmem:[%s409 + $0x10] sm:%s401] %v418
                  %v420 = vld [vmem:[%s408 + $0x28] sm:%s401]
                  %421 = vst [vmem:[%s409 + $0x14] sm:%s401] %v420
                  %v422 = vld [vmem:[%s408 + $0x30] sm:%s401]
                  %423 = vst [vmem:[%s409 + $0x18] sm:%s401] %v422
                  %v424 = vld [vmem:[%s408 + $0x38] sm:%s401]
                  %425 = vst [vmem:[%s409 + $0x1c] sm:%s401] %v424
                $region91: #{tpu_custom_call.1} parent=78 // loop_footer
                  %s407 = sadd.s32 1, %s403
                $region92: #{tpu_custom_call.1} parent=78 // loop_footer_branch
                  %402 = sbr.rel target = $region88
                $region93: #{tpu_custom_call.1} parent=78 // loop_exit
                  _
              $region79: #{tpu_custom_call.1} parent=63 // pred_fallthru
                _
            $region64: #{tpu_custom_call.1} parent=59 // pred_fallthru
              _
            // Predicated region
            $region65: #{tpu_custom_call.1} parent=59 // pred_check
              _
            $region66: #{tpu_custom_call.1} parent=59 // pred_check_branch
              %363 = sbr.rel (0) target = $region68
            $region67: #{tpu_custom_call.1} parent=59 // pred_region
              %s365 = ssub.s32 16, 1
              loop: start=0, step=1, limit=1
              $region69: #{tpu_custom_call.1} parent=67 // loop_pre_header
                _
              $region70: #{tpu_custom_call.1} parent=67 // loop_header
                %s367 = sphi 0, %s371
                %p368 = scmp.ge.s32.totalorder %s367, 1
                %s372 = sphi %s357, %s357
                %s373 = sphi %s355, %s355
              $region71: #{tpu_custom_call.1} parent=67 // loop_header_branch
                %370 = sbr.rel (%p368) target = $region75
              $region72: #{tpu_custom_call.1} parent=67 // loop_body
                %v374 = vld [vmem:[%s372] sm:%s365]
                %375 = vst [vmem:[%s373] sm:%s365] %v374
                %v376 = vld [vmem:[%s372 + $0x8] sm:%s365]
                %377 = vst [vmem:[%s373 + $0x4] sm:%s365] %v376
                %v378 = vld [vmem:[%s372 + $0x10] sm:%s365]
                %379 = vst [vmem:[%s373 + $0x8] sm:%s365] %v378
                %v380 = vld [vmem:[%s372 + $0x18] sm:%s365]
                %381 = vst [vmem:[%s373 + $0xc] sm:%s365] %v380
                %v382 = vld [vmem:[%s372 + $0x20] sm:%s365]
                %383 = vst [vmem:[%s373 + $0x10] sm:%s365] %v382
                %v384 = vld [vmem:[%s372 + $0x28] sm:%s365]
                %385 = vst [vmem:[%s373 + $0x14] sm:%s365] %v384
                %v386 = vld [vmem:[%s372 + $0x30] sm:%s365]
                %387 = vst [vmem:[%s373 + $0x18] sm:%s365] %v386
                %v388 = vld [vmem:[%s372 + $0x38] sm:%s365]
                %389 = vst [vmem:[%s373 + $0x1c] sm:%s365] %v388
              $region73: #{tpu_custom_call.1} parent=67 // loop_footer
                %s371 = sadd.s32 1, %s367
              $region74: #{tpu_custom_call.1} parent=67 // loop_footer_branch
                %366 = sbr.rel target = $region70
              $region75: #{tpu_custom_call.1} parent=67 // loop_exit
                _
            $region68: #{tpu_custom_call.1} parent=59 // pred_fallthru
              _
          $region60: #{tpu_custom_call.1} parent=55 // pred_fallthru
            _
          %426 = vnop
        $region56: #{tpu_custom_call.1} parent=51 // pred_fallthru
          _
      $region52: #{tpu_custom_call.1} parent=5 // pred_fallthru
        _
      %p427 = scmp.le.s32.totalorder 1, %s22
      %p428 = scmp.lt.s32.totalorder %s22, 3
      %p429 = pnand %p427, %p428
      %p430 = pneg %p429
      // Predicated region
      $region94: #{tpu_custom_call.1} parent=5 // pred_check
        _
      $region95: #{tpu_custom_call.1} parent=5 // pred_check_branch
        %432 = sbr.rel (%p429) target = $region97
      $region96: #{tpu_custom_call.1} parent=5 // pred_region
        %s433 = ssub.s32 %s22, 1
        %s434 = sand.u32 %s35, 1
        %s435 = sand.u32 %s35, 1
        %s436 = smul.addr %s435, 32
        %s437 = scalar_lea.vmem [#allocation5], %s436
        // Predicated region
        $region98: #{tpu_custom_call.1} parent=96 // pred_check
          %p438 = pneg %p48
        $region99: #{tpu_custom_call.1} parent=96 // pred_check_branch
          %440 = sbr.rel (%p438) target = $region101
        $region100: #{tpu_custom_call.1} parent=96 // pred_region
          _
        $region101: #{tpu_custom_call.1} parent=96 // pred_fallthru
          _
        // Predicated region
        $region102: #{tpu_custom_call.1} parent=96 // pred_check
          %p441 = pneg %p69
        $region103: #{tpu_custom_call.1} parent=96 // pred_check_branch
          %443 = sbr.rel (%p441) target = $region105
        $region104: #{tpu_custom_call.1} parent=96 // pred_region
          %444 = dma.done [#allocation7], 64
        $region105: #{tpu_custom_call.1} parent=96 // pred_fallthru
          _
        // Predicated region
        $region106: #{tpu_custom_call.1} parent=96 // pred_check
          %p445 = pneg %p111
        $region107: #{tpu_custom_call.1} parent=96 // pred_check_branch
          %447 = sbr.rel (%p445) target = $region109
        $region108: #{tpu_custom_call.1} parent=96 // pred_region
          %448 = dma.done [#allocation10], 16
        $region109: #{tpu_custom_call.1} parent=96 // pred_fallthru
          _
        // Predicated region
        $region110: #{tpu_custom_call.1} parent=96 // pred_check
          %p449 = pneg %p132
        $region111: #{tpu_custom_call.1} parent=96 // pred_check_branch
          %451 = sbr.rel (%p449) target = $region113
        $region112: #{tpu_custom_call.1} parent=96 // pred_region
          %452 = dma.done [#allocation10], 16
        $region113: #{tpu_custom_call.1} parent=96 // pred_fallthru
          _
        // Predicated region
        $region114: #{tpu_custom_call.1} parent=96 // pred_check
          %p453 = pneg %p174
        $region115: #{tpu_custom_call.1} parent=96 // pred_check_branch
          %455 = sbr.rel (%p453) target = $region117
        $region116: #{tpu_custom_call.1} parent=96 // pred_region
          %456 = dma.done [#allocation13], 16
        $region117: #{tpu_custom_call.1} parent=96 // pred_fallthru
          _
        // Predicated region
        $region118: #{tpu_custom_call.1} parent=96 // pred_check
          %p457 = pneg %p216
        $region119: #{tpu_custom_call.1} parent=96 // pred_check_branch
          %459 = sbr.rel (%p457) target = $region121
        $region120: #{tpu_custom_call.1} parent=96 // pred_region
          %460 = dma.done [#allocation13], 16
        $region121: #{tpu_custom_call.1} parent=96 // pred_fallthru
          _
        %s461 = sand.u32 %s35, 1
        %s462 = sand.u32 %s35, 1
        %s463 = smul.addr %s462, 32
        %s464 = scalar_lea.vmem [#allocation5], %s463
        %p465 = pneg %p48
        %p466 = pneg %p45
        %p467 = pneg %p69
        %p468 = pneg %p66
        %p469 = pneg %p90
        %p470 = pneg %p87
        %p471 = pneg %p111
        %p472 = pneg %p108
        %p473 = pneg %p132
        %p474 = pneg %p129
        %p475 = pneg %p153
        %p476 = pneg %p150
        %p477 = pneg %p174
        %p478 = pneg %p171
        %p479 = pneg %p195
        %p480 = pneg %p192
        %p481 = pneg %p216
        %p482 = pneg %p213
        %p483 = pneg %p237
        %p484 = pneg %p234
        %p485 = pneg %p263
        %p486 = pneg %p260
        %s487 = sand.u32 %s250, 1
        %s488 = scalar_lea.sflag [#allocation8], %s487
        %s489 = sand.u32 %s250, 1
        %s490 = smul.addr %s489, 8
        %s491 = scalar_lea.vmem [#allocation15], %s490
        %v493 = vld [vmem:[%s437] sm:$0xf]
        %v494 = vld [vmem:[%s437 + $0x4] sm:$0xf]
        %v495 = vld [vmem:[%s437 + $0x8] sm:$0xf]
        %v496 = vld [vmem:[%s437 + $0xc] sm:$0xf]
        %v497 = vld [vmem:[%s437 + $0x10] sm:$0xf]
        %v498 = vld [vmem:[%s437 + $0x14] sm:$0xf]
        %v499 = vld [vmem:[%s437 + $0x18] sm:$0xf]
        %v500 = vld [vmem:[%s437 + $0x1c] sm:$0xf]
        %v501 = vld [vmem:[#allocation6] sm:$0xf]
        %v502 = vld [vmem:[#allocation9] sm:$0x1]
        %v504 = vlaneseq
        %v505 = vshrl.u32 %v504, 7
        %v506 = vsub.s32 0, %v505
        %v507 = vrot.slane %v502, %v506
        %v517 = vunpack.c.l.b16 %v493
        %v518 = vunpack.c.l.b16 %v494
        %v519 = vunpack.c.l.b16 %v495
        %v520 = vunpack.c.l.b16 %v496
        %v521 = vunpack.c.l.b16 %v497
        %v522 = vunpack.c.l.b16 %v498
        %v523 = vunpack.c.l.b16 %v499
        %v524 = vunpack.c.l.b16 %v500
        %v525 = vpack.c.b16 %v518, %v517
        %v526 = vpack.c.b16 %v520, %v519
        %v527 = vpack.c.b16 %v522, %v521
        %v528 = vpack.c.b16 %v524, %v523
        %vm529 = vcmask 64512
        %v531 = vsel %vm529, %v525, 0
        %v534 = vsel %vm529, %v526, 0
        %v537 = vsel %vm529, %v527, 0
        %v540 = vsel %vm529, %v528, 0
        %vm542 = vcmask 1043456
        %v544 = vsel %vm542, %v501, 0
        %546 = vmatprep.subr.bf16.mxu0 0
        %547 = vmatpush1.bf16.msra.mxu0 0
        %548 = vmatprep.subr.bf16.mxu0 0
        %549 = vmatpush1.bf16.msra.mxu0 0
        %550 = vmatprep.subr.bf16.mxu0 0
        %551 = vmatpush1.bf16.msra.mxu0 0
        %552 = vmatprep.subr.bf16.mxu0 0
        %553 = vmatpush1.bf16.msra.mxu0 0
        %554 = vmatprep.subr.bf16.mxu0 0
        %555 = vmatpush1.bf16.msra.mxu0 0
        %556 = vmatprep.subr.bf16.mxu0 0
        %557 = vmatpush1.bf16.msra.mxu0 0
        %558 = vmatprep.subr.bf16.mxu0 0
        %559 = vmatpush1.bf16.msra.mxu0 0
        %560 = vmatprep.subr.bf16.mxu0 0
        %561 = vmatpush1.bf16.msra.mxu0 %v544
        %562 = vmatprep.subr.bf16.mxu0 0
        %563 = vmatpush2.bf16.msra.mxu0 0
        %564 = vmatprep.subr.bf16.mxu0 0
        %565 = vmatpush2.bf16.msra.mxu0 0
        %566 = vmatprep.subr.bf16.mxu0 0
        %567 = vmatpush2.bf16.msra.mxu0 0
        %568 = vmatprep.subr.bf16.mxu0 0
        %569 = vmatpush2.bf16.msra.mxu0 0
        %570 = vmatprep.subr.bf16.mxu0 0
        %571 = vmatpush2.bf16.msra.mxu0 0
        %572 = vmatprep.subr.bf16.mxu0 0
        %573 = vmatpush2.bf16.msra.mxu0 0
        %574 = vmatprep.subr.bf16.mxu0 0
        %575 = vmatpush2.bf16.msra.mxu0 0
        %576 = vmatprep.subr.bf16.mxu0 0
        %577 = vmatpush2.bf16.msra.mxu0 0
        %578 = vmatprep.mubr.bf16.mxu0 0
        %579 = vmatmul.mubr.bf16.gmra.mxu0 %v531
        %v580 = vpop.f32.mrf.mxu0
        %v581 = vadd.f32 %v507, %v580
        %v582 = vpop.f32.mrf.mxu0
        %v583 = vpop.f32.mrf.mxu0
        %v584 = vadd.f32 %v507, %v583
        %v585 = vpop.f32.mrf.mxu0
        %586 = vmatprep.mubr.bf16.mxu0 0
        %587 = vmatmul.mubr.bf16.gmra.mxu0 %v534
        %v588 = vpop.f32.mrf.mxu0
        %v589 = vadd.f32 %v507, %v588
        %v590 = vpop.f32.mrf.mxu0
        %v591 = vpop.f32.mrf.mxu0
        %v592 = vadd.f32 %v507, %v591
        %v593 = vpop.f32.mrf.mxu0
        %594 = vmatprep.mubr.bf16.mxu0 0
        %595 = vmatmul.mubr.bf16.gmra.mxu0 %v537
        %v596 = vpop.f32.mrf.mxu0
        %v597 = vadd.f32 %v507, %v596
        %v598 = vpop.f32.mrf.mxu0
        %v599 = vpop.f32.mrf.mxu0
        %v600 = vadd.f32 %v507, %v599
        %v601 = vpop.f32.mrf.mxu0
        %602 = vmatprep.mubr.bf16.mxu0 0
        %603 = vmatmul.mubr.bf16.gmra.mxu0 %v540
        %v604 = vpop.f32.mrf.mxu0
        %v605 = vadd.f32 %v507, %v604
        %v606 = vpop.f32.mrf.mxu0
        %v607 = vpop.f32.mrf.mxu0
        %v608 = vadd.f32 %v507, %v607
        %v609 = vpop.f32.mrf.mxu0
        %610 = vdwg.mxu0
        %vm611 = vcmask 785408
        %612 = vst.msk [vmem:[#allocation2] sm:$0xff] %vm611, %v581
        %613 = vst.msk [vmem:[#allocation2 + $0x8] sm:$0xff] %vm611, %v584
        %614 = vst.msk [vmem:[#allocation2 + $0x10] sm:$0xff] %vm611, %v589
        %615 = vst.msk [vmem:[#allocation2 + $0x18] sm:$0xff] %vm611, %v592
        %616 = vst.msk [vmem:[#allocation2 + $0x20] sm:$0xff] %vm611, %v597
        %617 = vst.msk [vmem:[#allocation2 + $0x28] sm:$0xff] %vm611, %v600
        %618 = vst.msk [vmem:[#allocation2 + $0x30] sm:$0xff] %vm611, %v605
        %619 = vst.msk [vmem:[#allocation2 + $0x38] sm:$0xff] %vm611, %v608
        %v620 = vld [vmem:[%s2] sm:$0xf]
        %v621 = vld [vmem:[%s2 + $0x4] sm:$0xf]
        %v622 = vld [vmem:[%s2 + $0x8] sm:$0xf]
        %v623 = vld [vmem:[%s2 + $0xc] sm:$0xf]
        %v624 = vld [vmem:[#allocation11] sm:$0x1]
        %v626 = vlaneseq
        %v627 = vshrl.u32 %v626, 7
        %v628 = vsub.s32 0, %v627
        %v629 = vrot.slane %v624, %v628
        %v630 = vld [vmem:[#allocation2] sm:$0xff]
        %v635 = vunpack.c.l.b16 %v620
        %v636 = vunpack.c.l.b16 %v621
        %v637 = vunpack.c.l.b16 %v622
        %v638 = vunpack.c.l.b16 %v623
        %v639 = vpack.c.b16 %v636, %v635
        %v640 = vpack.c.b16 %v638, %v637
        %vm643 = vcmask 261120
        %v645 = vsel %vm643, 0, 0
        %647 = vmatprep.subr.bf16.mxu0 0
        %648 = vmatpush1.bf16.msra.mxu0 0
        %649 = vmatprep.subr.bf16.mxu0 0
        %650 = vmatpush1.bf16.msra.mxu0 0
        %651 = vmatprep.subr.bf16.mxu0 0
        %652 = vmatpush1.bf16.msra.mxu0 0
        %653 = vmatprep.subr.bf16.mxu0 0
        %654 = vmatpush1.bf16.msra.mxu0 0
        %655 = vmatprep.subr.bf16.mxu0 0
        %656 = vmatpush1.bf16.msra.mxu0 0
        %657 = vmatprep.subr.bf16.mxu0 0
        %658 = vmatpush1.bf16.msra.mxu0 0
        %659 = vmatprep.subr.bf16.mxu0 0
        %660 = vmatpush1.bf16.msra.mxu0 %v640
        %661 = vmatprep.subr.bf16.mxu0 0
        %662 = vmatpush1.bf16.msra.mxu0 %v639
        %663 = vmatprep.subr.bf16.mxu0 0
        %664 = vmatpush2.bf16.msra.mxu0 0
        %665 = vmatprep.subr.bf16.mxu0 0
        %666 = vmatpush2.bf16.msra.mxu0 0
        %667 = vmatprep.subr.bf16.mxu0 0
        %668 = vmatpush2.bf16.msra.mxu0 0
        %669 = vmatprep.subr.bf16.mxu0 0
        %670 = vmatpush2.bf16.msra.mxu0 0
        %671 = vmatprep.subr.bf16.mxu0 0
        %672 = vmatpush2.bf16.msra.mxu0 0
        %673 = vmatprep.subr.bf16.mxu0 0
        %674 = vmatpush2.bf16.msra.mxu0 0
        %675 = vmatprep.subr.bf16.mxu0 0
        %676 = vmatpush2.bf16.msra.mxu0 0
        %677 = vmatprep.subr.bf16.mxu0 0
        %678 = vmatpush2.bf16.msra.mxu0 0
        %679 = vmatprep.mubr.bf16.mxu0 0
        %680 = vmatmul.mubr.bf16.gmra.mxu0 %v645
        %v681 = vpop.f32.mrf.mxu0
        %v682 = vadd.f32 0.0, %v681
        %v683 = vpop.f32.mrf.mxu0
        %v684 = vpop.f32.mrf.mxu0
        %v685 = vpop.f32.mrf.mxu0
        %686 = vdwg.mxu0
        %v687 = vadd.f32 %v630, %v682
        %v688 = vxor.u32 %v687, 2147483648
        %v689 = vmul.f32 %v688, 1.442695
        %v690 = vpow.pop %v689
        %v691 = vadd.f32 %v690, 1.0
        %v692 = vrcp.pop %v691
        %v693 = vmul.f32 1.0, %v692
        %694 = vrot.lane.b32.xlu0 %v629, 64
        %v695 = vpop.permute.xlu0 %694
        %v697 = vadd.f32 %v682, %v695
        %699 = vrot.lane.b32.xlu0 %v697, 64
        %v700 = vpop.permute.xlu0 %699
        %v702 = vmul.f32 %v693, %v700
        %704 = vrot.lane.b32.xlu0 %v702, 64
        %v705 = vpop.permute.xlu0 %704
        %v707 = vadd.f32 %v630, %v705
        %v708 = vtanh.pop %v707
        %v709 = vsub.f32 1.0, %v693
        %711 = vrot.lane.b32.xlu0 %v708, 96
        %v712 = vpop.permute.xlu0 %711
        %v714 = vmul.f32 %v709, %v712
        %v715 = vmul.f32 %v693, 0.0
        %v716 = vadd.f32 %v714, %v715
        %718 = vrot.lane.b32.xlu0 %v716, 96
        %v719 = vpop.permute.xlu0 %718
        %721 = vst.msk [vmem:[#allocation3] sm:$0xff] %vm643, %v719
        %s722 = scalar_lea.vmem [#allocation2], 8
        %v723 = vld [vmem:[%s722] sm:$0xff]
        %v724 = vpack.c.bf16 %v716, %v716
        %726 = vrot.lane.b32.xlu0 %v724, 96
        %v727 = vpop.permute.xlu0 %726
        %v729 = vsel %vm643, %v727, 0
        %731 = vmatprep.subr.bf16.mxu0 0
        %732 = vmatpush1.bf16.msra.mxu0 0
        %733 = vmatprep.subr.bf16.mxu0 0
        %734 = vmatpush1.bf16.msra.mxu0 0
        %735 = vmatprep.subr.bf16.mxu0 0
        %736 = vmatpush1.bf16.msra.mxu0 0
        %737 = vmatprep.subr.bf16.mxu0 0
        %738 = vmatpush1.bf16.msra.mxu0 0
        %739 = vmatprep.subr.bf16.mxu0 0
        %740 = vmatpush1.bf16.msra.mxu0 0
        %741 = vmatprep.subr.bf16.mxu0 0
        %742 = vmatpush1.bf16.msra.mxu0 0
        %743 = vmatprep.subr.bf16.mxu0 0
        %744 = vmatpush1.bf16.msra.mxu0 %v640
        %745 = vmatprep.subr.bf16.mxu0 0
        %746 = vmatpush1.bf16.msra.mxu0 %v639
        %747 = vmatprep.subr.bf16.mxu0 0
        %748 = vmatpush2.bf16.msra.mxu0 0
        %749 = vmatprep.subr.bf16.mxu0 0
        %750 = vmatpush2.bf16.msra.mxu0 0
        %751 = vmatprep.subr.bf16.mxu0 0
        %752 = vmatpush2.bf16.msra.mxu0 0
        %753 = vmatprep.subr.bf16.mxu0 0
        %754 = vmatpush2.bf16.msra.mxu0 0
        %755 = vmatprep.subr.bf16.mxu0 0
        %756 = vmatpush2.bf16.msra.mxu0 0
        %757 = vmatprep.subr.bf16.mxu0 0
        %758 = vmatpush2.bf16.msra.mxu0 0
        %759 = vmatprep.subr.bf16.mxu0 0
        %760 = vmatpush2.bf16.msra.mxu0 0
        %761 = vmatprep.subr.bf16.mxu0 0
        %762 = vmatpush2.bf16.msra.mxu0 0
        %763 = vmatprep.mubr.bf16.mxu0 0
        %764 = vmatmul.mubr.bf16.gmra.mxu0 %v729
        %v765 = vpop.f32.mrf.mxu0
        %v766 = vadd.f32 0.0, %v765
        %v767 = vpop.f32.mrf.mxu0
        %v768 = vpop.f32.mrf.mxu0
        %v769 = vpop.f32.mrf.mxu0
        %770 = vdwg.mxu0
        %v771 = vadd.f32 %v723, %v766
        %v772 = vxor.u32 %v771, 2147483648
        %v773 = vmul.f32 %v772, 1.442695
        %v774 = vpow.pop %v773
        %v775 = vadd.f32 %v774, 1.0
        %v776 = vrcp.pop %v775
        %v777 = vmul.f32 1.0, %v776
        %v778 = vadd.f32 %v766, %v695
        %780 = vrot.lane.b32.xlu0 %v778, 64
        %v781 = vpop.permute.xlu0 %780
        %v783 = vmul.f32 %v777, %v781
        %785 = vrot.lane.b32.xlu0 %v783, 64
        %v786 = vpop.permute.xlu0 %785
        %v788 = vadd.f32 %v723, %v786
        %v789 = vtanh.pop %v788
        %v790 = vsub.f32 1.0, %v777
        %792 = vrot.lane.b32.xlu0 %v789, 96
        %v793 = vpop.permute.xlu0 %792
        %v795 = vmul.f32 %v790, %v793
        %v796 = vmul.f32 %v777, %v716
        %v797 = vadd.f32 %v795, %v796
        %799 = vrot.lane.b32.xlu0 %v797, 96
        %v800 = vpop.permute.xlu0 %799
        %s802 = scalar_lea.vmem [#allocation3], 8
        %803 = vst.msk [vmem:[%s802] sm:$0xff] %vm643, %v800
        %s804 = scalar_lea.vmem [#allocation2], 16
        %v805 = vld [vmem:[%s804] sm:$0xff]
        %v806 = vpack.c.bf16 %v797, %v797
        %808 = vrot.lane.b32.xlu0 %v806, 96
        %v809 = vpop.permute.xlu0 %808
        %v811 = vsel %vm643, %v809, 0
        %813 = vmatprep.subr.bf16.mxu0 0
        %814 = vmatpush1.bf16.msra.mxu0 0
        %815 = vmatprep.subr.bf16.mxu0 0
        %816 = vmatpush1.bf16.msra.mxu0 0
        %817 = vmatprep.subr.bf16.mxu0 0
        %818 = vmatpush1.bf16.msra.mxu0 0
        %819 = vmatprep.subr.bf16.mxu0 0
        %820 = vmatpush1.bf16.msra.mxu0 0
        %821 = vmatprep.subr.bf16.mxu0 0
        %822 = vmatpush1.bf16.msra.mxu0 0
        %823 = vmatprep.subr.bf16.mxu0 0
        %824 = vmatpush1.bf16.msra.mxu0 0
        %825 = vmatprep.subr.bf16.mxu0 0
        %826 = vmatpush1.bf16.msra.mxu0 %v640
        %827 = vmatprep.subr.bf16.mxu0 0
        %828 = vmatpush1.bf16.msra.mxu0 %v639
        %829 = vmatprep.subr.bf16.mxu0 0
        %830 = vmatpush2.bf16.msra.mxu0 0
        %831 = vmatprep.subr.bf16.mxu0 0
        %832 = vmatpush2.bf16.msra.mxu0 0
        %833 = vmatprep.subr.bf16.mxu0 0
        %834 = vmatpush2.bf16.msra.mxu0 0
        %835 = vmatprep.subr.bf16.mxu0 0
        %836 = vmatpush2.bf16.msra.mxu0 0
        %837 = vmatprep.subr.bf16.mxu0 0
        %838 = vmatpush2.bf16.msra.mxu0 0
        %839 = vmatprep.subr.bf16.mxu0 0
        %840 = vmatpush2.bf16.msra.mxu0 0
        %841 = vmatprep.subr.bf16.mxu0 0
        %842 = vmatpush2.bf16.msra.mxu0 0
        %843 = vmatprep.subr.bf16.mxu0 0
        %844 = vmatpush2.bf16.msra.mxu0 0
        %845 = vmatprep.mubr.bf16.mxu0 0
        %846 = vmatmul.mubr.bf16.gmra.mxu0 %v811
        %v847 = vpop.f32.mrf.mxu0
        %v848 = vadd.f32 0.0, %v847
        %v849 = vpop.f32.mrf.mxu0
        %v850 = vpop.f32.mrf.mxu0
        %v851 = vpop.f32.mrf.mxu0
        %852 = vdwg.mxu0
        %v853 = vadd.f32 %v805, %v848
        %v854 = vxor.u32 %v853, 2147483648
        %v855 = vmul.f32 %v854, 1.442695
        %v856 = vpow.pop %v855
        %v857 = vadd.f32 %v856, 1.0
        %v858 = vrcp.pop %v857
        %v859 = vmul.f32 1.0, %v858
        %v860 = vadd.f32 %v848, %v695
        %862 = vrot.lane.b32.xlu0 %v860, 64
        %v863 = vpop.permute.xlu0 %862
        %v865 = vmul.f32 %v859, %v863
        %867 = vrot.lane.b32.xlu0 %v865, 64
        %v868 = vpop.permute.xlu0 %867
        %v870 = vadd.f32 %v805, %v868
        %v871 = vtanh.pop %v870
        %v872 = vsub.f32 1.0, %v859
        %874 = vrot.lane.b32.xlu0 %v871, 96
        %v875 = vpop.permute.xlu0 %874
        %v877 = vmul.f32 %v872, %v875
        %v878 = vmul.f32 %v859, %v797
        %v879 = vadd.f32 %v877, %v878
        %881 = vrot.lane.b32.xlu0 %v879, 96
        %v882 = vpop.permute.xlu0 %881
        %s884 = scalar_lea.vmem [#allocation3], 16
        %885 = vst.msk [vmem:[%s884] sm:$0xff] %vm643, %v882
        %s886 = scalar_lea.vmem [#allocation2], 24
        %v887 = vld [vmem:[%s886] sm:$0xff]
        %v888 = vpack.c.bf16 %v879, %v879
        %890 = vrot.lane.b32.xlu0 %v888, 96
        %v891 = vpop.permute.xlu0 %890
        %v893 = vsel %vm643, %v891, 0
        %895 = vmatprep.subr.bf16.mxu0 0
        %896 = vmatpush1.bf16.msra.mxu0 0
        %897 = vmatprep.subr.bf16.mxu0 0
        %898 = vmatpush1.bf16.msra.mxu0 0
        %899 = vmatprep.subr.bf16.mxu0 0
        %900 = vmatpush1.bf16.msra.mxu0 0
        %901 = vmatprep.subr.bf16.mxu0 0
        %902 = vmatpush1.bf16.msra.mxu0 0
        %903 = vmatprep.subr.bf16.mxu0 0
        %904 = vmatpush1.bf16.msra.mxu0 0
        %905 = vmatprep.subr.bf16.mxu0 0
        %906 = vmatpush1.bf16.msra.mxu0 0
        %907 = vmatprep.subr.bf16.mxu0 0
        %908 = vmatpush1.bf16.msra.mxu0 %v640
        %909 = vmatprep.subr.bf16.mxu0 0
        %910 = vmatpush1.bf16.msra.mxu0 %v639
        %911 = vmatprep.subr.bf16.mxu0 0
        %912 = vmatpush2.bf16.msra.mxu0 0
        %913 = vmatprep.subr.bf16.mxu0 0
        %914 = vmatpush2.bf16.msra.mxu0 0
        %915 = vmatprep.subr.bf16.mxu0 0
        %916 = vmatpush2.bf16.msra.mxu0 0
        %917 = vmatprep.subr.bf16.mxu0 0
        %918 = vmatpush2.bf16.msra.mxu0 0
        %919 = vmatprep.subr.bf16.mxu0 0
        %920 = vmatpush2.bf16.msra.mxu0 0
        %921 = vmatprep.subr.bf16.mxu0 0
        %922 = vmatpush2.bf16.msra.mxu0 0
        %923 = vmatprep.subr.bf16.mxu0 0
        %924 = vmatpush2.bf16.msra.mxu0 0
        %925 = vmatprep.subr.bf16.mxu0 0
        %926 = vmatpush2.bf16.msra.mxu0 0
        %927 = vmatprep.mubr.bf16.mxu0 0
        %928 = vmatmul.mubr.bf16.gmra.mxu0 %v893
        %v929 = vpop.f32.mrf.mxu0
        %v930 = vadd.f32 0.0, %v929
        %v931 = vpop.f32.mrf.mxu0
        %v932 = vpop.f32.mrf.mxu0
        %v933 = vpop.f32.mrf.mxu0
        %934 = vdwg.mxu0
        %v935 = vadd.f32 %v887, %v930
        %v936 = vxor.u32 %v935, 2147483648
        %v937 = vmul.f32 %v936, 1.442695
        %v938 = vpow.pop %v937
        %v939 = vadd.f32 %v938, 1.0
        %v940 = vrcp.pop %v939
        %v941 = vmul.f32 1.0, %v940
        %v942 = vadd.f32 %v930, %v695
        %944 = vrot.lane.b32.xlu0 %v942, 64
        %v945 = vpop.permute.xlu0 %944
        %v947 = vmul.f32 %v941, %v945
        %949 = vrot.lane.b32.xlu0 %v947, 64
        %v950 = vpop.permute.xlu0 %949
        %v952 = vadd.f32 %v887, %v950
        %v953 = vtanh.pop %v952
        %v954 = vsub.f32 1.0, %v941
        %956 = vrot.lane.b32.xlu0 %v953, 96
        %v957 = vpop.permute.xlu0 %956
        %v959 = vmul.f32 %v954, %v957
        %v960 = vmul.f32 %v941, %v879
        %v961 = vadd.f32 %v959, %v960
        %963 = vrot.lane.b32.xlu0 %v961, 96
        %v964 = vpop.permute.xlu0 %963
        %s966 = scalar_lea.vmem [#allocation3], 24
        %967 = vst.msk [vmem:[%s966] sm:$0xff] %vm643, %v964
        %s968 = scalar_lea.vmem [#allocation2], 32
        %v969 = vld [vmem:[%s968] sm:$0xff]
        %v970 = vpack.c.bf16 %v961, %v961
        %972 = vrot.lane.b32.xlu0 %v970, 96
        %v973 = vpop.permute.xlu0 %972
        %v975 = vsel %vm643, %v973, 0
        %977 = vmatprep.subr.bf16.mxu0 0
        %978 = vmatpush1.bf16.msra.mxu0 0
        %979 = vmatprep.subr.bf16.mxu0 0
        %980 = vmatpush1.bf16.msra.mxu0 0
        %981 = vmatprep.subr.bf16.mxu0 0
        %982 = vmatpush1.bf16.msra.mxu0 0
        %983 = vmatprep.subr.bf16.mxu0 0
        %984 = vmatpush1.bf16.msra.mxu0 0
        %985 = vmatprep.subr.bf16.mxu0 0
        %986 = vmatpush1.bf16.msra.mxu0 0
        %987 = vmatprep.subr.bf16.mxu0 0
        %988 = vmatpush1.bf16.msra.mxu0 0
        %989 = vmatprep.subr.bf16.mxu0 0
        %990 = vmatpush1.bf16.msra.mxu0 %v640
        %991 = vmatprep.subr.bf16.mxu0 0
        %992 = vmatpush1.bf16.msra.mxu0 %v639
        %993 = vmatprep.subr.bf16.mxu0 0
        %994 = vmatpush2.bf16.msra.mxu0 0
        %995 = vmatprep.subr.bf16.mxu0 0
        %996 = vmatpush2.bf16.msra.mxu0 0
        %997 = vmatprep.subr.bf16.mxu0 0
        %998 = vmatpush2.bf16.msra.mxu0 0
        %999 = vmatprep.subr.bf16.mxu0 0
        %1000 = vmatpush2.bf16.msra.mxu0 0
        %1001 = vmatprep.subr.bf16.mxu0 0
        %1002 = vmatpush2.bf16.msra.mxu0 0
        %1003 = vmatprep.subr.bf16.mxu0 0
        %1004 = vmatpush2.bf16.msra.mxu0 0
        %1005 = vmatprep.subr.bf16.mxu0 0
        %1006 = vmatpush2.bf16.msra.mxu0 0
        %1007 = vmatprep.subr.bf16.mxu0 0
        %1008 = vmatpush2.bf16.msra.mxu0 0
        %1009 = vmatprep.mubr.bf16.mxu0 0
        %1010 = vmatmul.mubr.bf16.gmra.mxu0 %v975
        %v1011 = vpop.f32.mrf.mxu0
        %v1012 = vadd.f32 0.0, %v1011
        %v1013 = vpop.f32.mrf.mxu0
        %v1014 = vpop.f32.mrf.mxu0
        %v1015 = vpop.f32.mrf.mxu0
        %1016 = vdwg.mxu0
        %v1017 = vadd.f32 %v969, %v1012
        %v1018 = vxor.u32 %v1017, 2147483648
        %v1019 = vmul.f32 %v1018, 1.442695
        %v1020 = vpow.pop %v1019
        %v1021 = vadd.f32 %v1020, 1.0
        %v1022 = vrcp.pop %v1021
        %v1023 = vmul.f32 1.0, %v1022
        %v1024 = vadd.f32 %v1012, %v695
        %1026 = vrot.lane.b32.xlu0 %v1024, 64
        %v1027 = vpop.permute.xlu0 %1026
        %v1029 = vmul.f32 %v1023, %v1027
        %1031 = vrot.lane.b32.xlu0 %v1029, 64
        %v1032 = vpop.permute.xlu0 %1031
        %v1034 = vadd.f32 %v969, %v1032
        %v1035 = vtanh.pop %v1034
        %v1036 = vsub.f32 1.0, %v1023
        %1038 = vrot.lane.b32.xlu0 %v1035, 96
        %v1039 = vpop.permute.xlu0 %1038
        %v1041 = vmul.f32 %v1036, %v1039
        %v1042 = vmul.f32 %v1023, %v961
        %v1043 = vadd.f32 %v1041, %v1042
        %1045 = vrot.lane.b32.xlu0 %v1043, 96
        %v1046 = vpop.permute.xlu0 %1045
        %s1048 = scalar_lea.vmem [#allocation3], 32
        %1049 = vst.msk [vmem:[%s1048] sm:$0xff] %vm643, %v1046
        %s1050 = scalar_lea.vmem [#allocation2], 40
        %v1051 = vld [vmem:[%s1050] sm:$0xff]
        %v1052 = vpack.c.bf16 %v1043, %v1043
        %1054 = vrot.lane.b32.xlu0 %v1052, 96
        %v1055 = vpop.permute.xlu0 %1054
        %v1057 = vsel %vm643, %v1055, 0
        %1059 = vmatprep.subr.bf16.mxu0 0
        %1060 = vmatpush1.bf16.msra.mxu0 0
        %1061 = vmatprep.subr.bf16.mxu0 0
        %1062 = vmatpush1.bf16.msra.mxu0 0
        %1063 = vmatprep.subr.bf16.mxu0 0
        %1064 = vmatpush1.bf16.msra.mxu0 0
        %1065 = vmatprep.subr.bf16.mxu0 0
        %1066 = vmatpush1.bf16.msra.mxu0 0
        %1067 = vmatprep.subr.bf16.mxu0 0
        %1068 = vmatpush1.bf16.msra.mxu0 0
        %1069 = vmatprep.subr.bf16.mxu0 0
        %1070 = vmatpush1.bf16.msra.mxu0 0
        %1071 = vmatprep.subr.bf16.mxu0 0
        %1072 = vmatpush1.bf16.msra.mxu0 %v640
        %1073 = vmatprep.subr.bf16.mxu0 0
        %1074 = vmatpush1.bf16.msra.mxu0 %v639
        %1075 = vmatprep.subr.bf16.mxu0 0
        %1076 = vmatpush2.bf16.msra.mxu0 0
        %1077 = vmatprep.subr.bf16.mxu0 0
        %1078 = vmatpush2.bf16.msra.mxu0 0
        %1079 = vmatprep.subr.bf16.mxu0 0
        %1080 = vmatpush2.bf16.msra.mxu0 0
        %1081 = vmatprep.subr.bf16.mxu0 0
        %1082 = vmatpush2.bf16.msra.mxu0 0
        %1083 = vmatprep.subr.bf16.mxu0 0
        %1084 = vmatpush2.bf16.msra.mxu0 0
        %1085 = vmatprep.subr.bf16.mxu0 0
        %1086 = vmatpush2.bf16.msra.mxu0 0
        %1087 = vmatprep.subr.bf16.mxu0 0
        %1088 = vmatpush2.bf16.msra.mxu0 0
        %1089 = vmatprep.subr.bf16.mxu0 0
        %1090 = vmatpush2.bf16.msra.mxu0 0
        %1091 = vmatprep.mubr.bf16.mxu0 0
        %1092 = vmatmul.mubr.bf16.gmra.mxu0 %v1057
        %v1093 = vpop.f32.mrf.mxu0
        %v1094 = vadd.f32 0.0, %v1093
        %v1095 = vpop.f32.mrf.mxu0
        %v1096 = vpop.f32.mrf.mxu0
        %v1097 = vpop.f32.mrf.mxu0
        %1098 = vdwg.mxu0
        %v1099 = vadd.f32 %v1051, %v1094
        %v1100 = vxor.u32 %v1099, 2147483648
        %v1101 = vmul.f32 %v1100, 1.442695
        %v1102 = vpow.pop %v1101
        %v1103 = vadd.f32 %v1102, 1.0
        %v1104 = vrcp.pop %v1103
        %v1105 = vmul.f32 1.0, %v1104
        %v1106 = vadd.f32 %v1094, %v695
        %1108 = vrot.lane.b32.xlu0 %v1106, 64
        %v1109 = vpop.permute.xlu0 %1108
        %v1111 = vmul.f32 %v1105, %v1109
        %1113 = vrot.lane.b32.xlu0 %v1111, 64
        %v1114 = vpop.permute.xlu0 %1113
        %v1116 = vadd.f32 %v1051, %v1114
        %v1117 = vtanh.pop %v1116
        %v1118 = vsub.f32 1.0, %v1105
        %1120 = vrot.lane.b32.xlu0 %v1117, 96
        %v1121 = vpop.permute.xlu0 %1120
        %v1123 = vmul.f32 %v1118, %v1121
        %v1124 = vmul.f32 %v1105, %v1043
        %v1125 = vadd.f32 %v1123, %v1124
        %1127 = vrot.lane.b32.xlu0 %v1125, 96
        %v1128 = vpop.permute.xlu0 %1127
        %s1130 = scalar_lea.vmem [#allocation3], 40
        %1131 = vst.msk [vmem:[%s1130] sm:$0xff] %vm643, %v1128
        %s1132 = scalar_lea.vmem [#allocation2], 48
        %v1133 = vld [vmem:[%s1132] sm:$0xff]
        %v1134 = vpack.c.bf16 %v1125, %v1125
        %1136 = vrot.lane.b32.xlu0 %v1134, 96
        %v1137 = vpop.permute.xlu0 %1136
        %v1139 = vsel %vm643, %v1137, 0
        %1141 = vmatprep.subr.bf16.mxu0 0
        %1142 = vmatpush1.bf16.msra.mxu0 0
        %1143 = vmatprep.subr.bf16.mxu0 0
        %1144 = vmatpush1.bf16.msra.mxu0 0
        %1145 = vmatprep.subr.bf16.mxu0 0
        %1146 = vmatpush1.bf16.msra.mxu0 0
        %1147 = vmatprep.subr.bf16.mxu0 0
        %1148 = vmatpush1.bf16.msra.mxu0 0
        %1149 = vmatprep.subr.bf16.mxu0 0
        %1150 = vmatpush1.bf16.msra.mxu0 0
        %1151 = vmatprep.subr.bf16.mxu0 0
        %1152 = vmatpush1.bf16.msra.mxu0 0
        %1153 = vmatprep.subr.bf16.mxu0 0
        %1154 = vmatpush1.bf16.msra.mxu0 %v640
        %1155 = vmatprep.subr.bf16.mxu0 0
        %1156 = vmatpush1.bf16.msra.mxu0 %v639
        %1157 = vmatprep.subr.bf16.mxu0 0
        %1158 = vmatpush2.bf16.msra.mxu0 0
        %1159 = vmatprep.subr.bf16.mxu0 0
        %1160 = vmatpush2.bf16.msra.mxu0 0
        %1161 = vmatprep.subr.bf16.mxu0 0
        %1162 = vmatpush2.bf16.msra.mxu0 0
        %1163 = vmatprep.subr.bf16.mxu0 0
        %1164 = vmatpush2.bf16.msra.mxu0 0
        %1165 = vmatprep.subr.bf16.mxu0 0
        %1166 = vmatpush2.bf16.msra.mxu0 0
        %1167 = vmatprep.subr.bf16.mxu0 0
        %1168 = vmatpush2.bf16.msra.mxu0 0
        %1169 = vmatprep.subr.bf16.mxu0 0
        %1170 = vmatpush2.bf16.msra.mxu0 0
        %1171 = vmatprep.subr.bf16.mxu0 0
        %1172 = vmatpush2.bf16.msra.mxu0 0
        %1173 = vmatprep.mubr.bf16.mxu0 0
        %1174 = vmatmul.mubr.bf16.gmra.mxu0 %v1139
        %v1175 = vpop.f32.mrf.mxu0
        %v1176 = vadd.f32 0.0, %v1175
        %v1177 = vpop.f32.mrf.mxu0
        %v1178 = vpop.f32.mrf.mxu0
        %v1179 = vpop.f32.mrf.mxu0
        %1180 = vdwg.mxu0
        %v1181 = vadd.f32 %v1133, %v1176
        %v1182 = vxor.u32 %v1181, 2147483648
        %v1183 = vmul.f32 %v1182, 1.442695
        %v1184 = vpow.pop %v1183
        %v1185 = vadd.f32 %v1184, 1.0
        %v1186 = vrcp.pop %v1185
        %v1187 = vmul.f32 1.0, %v1186
        %v1188 = vadd.f32 %v1176, %v695
        %1190 = vrot.lane.b32.xlu0 %v1188, 64
        %v1191 = vpop.permute.xlu0 %1190
        %v1193 = vmul.f32 %v1187, %v1191
        %1195 = vrot.lane.b32.xlu0 %v1193, 64
        %v1196 = vpop.permute.xlu0 %1195
        %v1198 = vadd.f32 %v1133, %v1196
        %v1199 = vtanh.pop %v1198
        %v1200 = vsub.f32 1.0, %v1187
        %1202 = vrot.lane.b32.xlu0 %v1199, 96
        %v1203 = vpop.permute.xlu0 %1202
        %v1205 = vmul.f32 %v1200, %v1203
        %v1206 = vmul.f32 %v1187, %v1125
        %v1207 = vadd.f32 %v1205, %v1206
        %1209 = vrot.lane.b32.xlu0 %v1207, 96
        %v1210 = vpop.permute.xlu0 %1209
        %s1212 = scalar_lea.vmem [#allocation3], 48
        %1213 = vst.msk [vmem:[%s1212] sm:$0xff] %vm643, %v1210
        %s1214 = scalar_lea.vmem [#allocation2], 56
        %v1215 = vld [vmem:[%s1214] sm:$0xff]
        %v1216 = vpack.c.bf16 %v1207, %v1207
        %1218 = vrot.lane.b32.xlu0 %v1216, 96
        %v1219 = vpop.permute.xlu0 %1218
        %v1221 = vsel %vm643, %v1219, 0
        %1223 = vmatprep.subr.bf16.mxu0 0
        %1224 = vmatpush1.bf16.msra.mxu0 0
        %1225 = vmatprep.subr.bf16.mxu0 0
        %1226 = vmatpush1.bf16.msra.mxu0 0
        %1227 = vmatprep.subr.bf16.mxu0 0
        %1228 = vmatpush1.bf16.msra.mxu0 0
        %1229 = vmatprep.subr.bf16.mxu0 0
        %1230 = vmatpush1.bf16.msra.mxu0 0
        %1231 = vmatprep.subr.bf16.mxu0 0
        %1232 = vmatpush1.bf16.msra.mxu0 0
        %1233 = vmatprep.subr.bf16.mxu0 0
        %1234 = vmatpush1.bf16.msra.mxu0 0
        %1235 = vmatprep.subr.bf16.mxu0 0
        %1236 = vmatpush1.bf16.msra.mxu0 %v640
        %1237 = vmatprep.subr.bf16.mxu0 0
        %1238 = vmatpush1.bf16.msra.mxu0 %v639
        %1239 = vmatprep.subr.bf16.mxu0 0
        %1240 = vmatpush2.bf16.msra.mxu0 0
        %1241 = vmatprep.subr.bf16.mxu0 0
        %1242 = vmatpush2.bf16.msra.mxu0 0
        %1243 = vmatprep.subr.bf16.mxu0 0
        %1244 = vmatpush2.bf16.msra.mxu0 0
        %1245 = vmatprep.subr.bf16.mxu0 0
        %1246 = vmatpush2.bf16.msra.mxu0 0
        %1247 = vmatprep.subr.bf16.mxu0 0
        %1248 = vmatpush2.bf16.msra.mxu0 0
        %1249 = vmatprep.subr.bf16.mxu0 0
        %1250 = vmatpush2.bf16.msra.mxu0 0
        %1251 = vmatprep.subr.bf16.mxu0 0
        %1252 = vmatpush2.bf16.msra.mxu0 0
        %1253 = vmatprep.subr.bf16.mxu0 0
        %1254 = vmatpush2.bf16.msra.mxu0 0
        %1255 = vmatprep.mubr.bf16.mxu0 0
        %1256 = vmatmul.mubr.bf16.gmra.mxu0 %v1221
        %v1257 = vpop.f32.mrf.mxu0
        %v1258 = vadd.f32 0.0, %v1257
        %v1259 = vpop.f32.mrf.mxu0
        %v1260 = vpop.f32.mrf.mxu0
        %v1261 = vpop.f32.mrf.mxu0
        %1262 = vdwg.mxu0
        %v1263 = vadd.f32 %v1215, %v1258
        %v1264 = vxor.u32 %v1263, 2147483648
        %v1265 = vmul.f32 %v1264, 1.442695
        %v1266 = vpow.pop %v1265
        %v1267 = vadd.f32 %v1266, 1.0
        %v1268 = vrcp.pop %v1267
        %v1269 = vmul.f32 1.0, %v1268
        %v1270 = vadd.f32 %v1258, %v695
        %1272 = vrot.lane.b32.xlu0 %v1270, 64
        %v1273 = vpop.permute.xlu0 %1272
        %v1275 = vmul.f32 %v1269, %v1273
        %1277 = vrot.lane.b32.xlu0 %v1275, 64
        %v1278 = vpop.permute.xlu0 %1277
        %v1280 = vadd.f32 %v1215, %v1278
        %v1281 = vtanh.pop %v1280
        %v1282 = vsub.f32 1.0, %v1269
        %1284 = vrot.lane.b32.xlu0 %v1281, 96
        %v1285 = vpop.permute.xlu0 %1284
        %v1287 = vmul.f32 %v1282, %v1285
        %v1288 = vmul.f32 %v1269, %v1207
        %v1289 = vadd.f32 %v1287, %v1288
        %1291 = vrot.lane.b32.xlu0 %v1289, 96
        %v1292 = vpop.permute.xlu0 %1291
        %s1294 = scalar_lea.vmem [#allocation3], 56
        %1295 = vst.msk [vmem:[%s1294] sm:$0xff] %vm643, %v1292
        %v1296 = vld [vmem:[#allocation3] sm:$0xff]
        %v1297 = vld [vmem:[#allocation3 + $0x8] sm:$0xff]
        %v1298 = vld [vmem:[#allocation3 + $0x10] sm:$0xff]
        %v1299 = vld [vmem:[#allocation3 + $0x18] sm:$0xff]
        %v1300 = vld [vmem:[#allocation3 + $0x20] sm:$0xff]
        %v1301 = vld [vmem:[#allocation3 + $0x28] sm:$0xff]
        %v1302 = vld [vmem:[#allocation3 + $0x30] sm:$0xff]
        %v1303 = vld [vmem:[#allocation3 + $0x38] sm:$0xff]
        %v1304 = vpack.c.bf16 %v1297, %v1296
        %v1305 = vpack.c.bf16 %v1299, %v1298
        %v1306 = vpack.c.bf16 %v1301, %v1300
        %v1307 = vpack.c.bf16 %v1303, %v1302
        %v1308 = vld [vmem:[%s5] sm:$0xf]
        %v1309 = vld [vmem:[%s5 + $0x4] sm:$0xf]
        %v1310 = vld [vmem:[%s5 + $0x8] sm:$0xf]
        %v1311 = vld [vmem:[%s5 + $0xc] sm:$0xf]
        %v1312 = vld [vmem:[#allocation12] sm:$0x1]
        %v1314 = vlaneseq
        %v1315 = vshrl.u32 %v1314, 7
        %v1316 = vsub.s32 0, %v1315
        %v1317 = vrot.slane %v1312, %v1316
        %v1323 = vunpack.c.l.b16 %v1308
        %v1324 = vunpack.c.l.b16 %v1309
        %v1325 = vunpack.c.l.b16 %v1310
        %v1326 = vunpack.c.l.b16 %v1311
        %v1327 = vpack.c.b16 %v1324, %v1323
        %v1328 = vpack.c.b16 %v1326, %v1325
        %v1332 = vsel %vm643, %v1304, 0
        %v1335 = vsel %vm643, %v1305, 0
        %v1338 = vsel %vm643, %v1306, 0
        %v1341 = vsel %vm643, %v1307, 0
        %1343 = vmatprep.subr.bf16.mxu0 0
        %1344 = vmatpush1.bf16.msra.mxu0 0
        %1345 = vmatprep.subr.bf16.mxu0 0
        %1346 = vmatpush1.bf16.msra.mxu0 0
        %1347 = vmatprep.subr.bf16.mxu0 0
        %1348 = vmatpush1.bf16.msra.mxu0 0
        %1349 = vmatprep.subr.bf16.mxu0 0
        %1350 = vmatpush1.bf16.msra.mxu0 0
        %1351 = vmatprep.subr.bf16.mxu0 0
        %1352 = vmatpush1.bf16.msra.mxu0 0
        %1353 = vmatprep.subr.bf16.mxu0 0
        %1354 = vmatpush1.bf16.msra.mxu0 0
        %1355 = vmatprep.subr.bf16.mxu0 0
        %1356 = vmatpush1.bf16.msra.mxu0 %v1328
        %1357 = vmatprep.subr.bf16.mxu0 0
        %1358 = vmatpush1.bf16.msra.mxu0 %v1327
        %1359 = vmatprep.subr.bf16.mxu0 0
        %1360 = vmatpush2.bf16.msra.mxu0 0
        %1361 = vmatprep.subr.bf16.mxu0 0
        %1362 = vmatpush2.bf16.msra.mxu0 0
        %1363 = vmatprep.subr.bf16.mxu0 0
        %1364 = vmatpush2.bf16.msra.mxu0 0
        %1365 = vmatprep.subr.bf16.mxu0 0
        %1366 = vmatpush2.bf16.msra.mxu0 0
        %1367 = vmatprep.subr.bf16.mxu0 0
        %1368 = vmatpush2.bf16.msra.mxu0 0
        %1369 = vmatprep.subr.bf16.mxu0 0
        %1370 = vmatpush2.bf16.msra.mxu0 0
        %1371 = vmatprep.subr.bf16.mxu0 0
        %1372 = vmatpush2.bf16.msra.mxu0 0
        %1373 = vmatprep.subr.bf16.mxu0 0
        %1374 = vmatpush2.bf16.msra.mxu0 0
        %1375 = vmatprep.mubr.bf16.mxu0 0
        %1376 = vmatmul.mubr.bf16.gmra.mxu0 %v1332
        %v1377 = vpop.f32.mrf.mxu0
        %v1378 = vadd.f32 %v1317, %v1377
        %v1379 = vpop.f32.mrf.mxu0
        %v1380 = vpop.f32.mrf.mxu0
        %v1381 = vadd.f32 %v1317, %v1380
        %v1382 = vpop.f32.mrf.mxu0
        %1383 = vmatprep.mubr.bf16.mxu0 0
        %1384 = vmatmul.mubr.bf16.gmra.mxu0 %v1335
        %v1385 = vpop.f32.mrf.mxu0
        %v1386 = vadd.f32 %v1317, %v1385
        %v1387 = vpop.f32.mrf.mxu0
        %v1388 = vpop.f32.mrf.mxu0
        %v1389 = vadd.f32 %v1317, %v1388
        %v1390 = vpop.f32.mrf.mxu0
        %1391 = vmatprep.mubr.bf16.mxu0 0
        %1392 = vmatmul.mubr.bf16.gmra.mxu0 %v1338
        %v1393 = vpop.f32.mrf.mxu0
        %v1394 = vadd.f32 %v1317, %v1393
        %v1395 = vpop.f32.mrf.mxu0
        %v1396 = vpop.f32.mrf.mxu0
        %v1397 = vadd.f32 %v1317, %v1396
        %v1398 = vpop.f32.mrf.mxu0
        %1399 = vmatprep.mubr.bf16.mxu0 0
        %1400 = vmatmul.mubr.bf16.gmra.mxu0 %v1341
        %v1401 = vpop.f32.mrf.mxu0
        %v1402 = vadd.f32 %v1317, %v1401
        %v1403 = vpop.f32.mrf.mxu0
        %v1404 = vpop.f32.mrf.mxu0
        %v1405 = vadd.f32 %v1317, %v1404
        %v1406 = vpop.f32.mrf.mxu0
        %1407 = vdwg.mxu0
        %1408 = vst.msk [vmem:[#allocation4] sm:$0xff] %vm611, %v1378
        %1409 = vst.msk [vmem:[#allocation4 + $0x8] sm:$0xff] %vm611, %v1381
        %1410 = vst.msk [vmem:[#allocation4 + $0x10] sm:$0xff] %vm611, %v1386
        %1411 = vst.msk [vmem:[#allocation4 + $0x18] sm:$0xff] %vm611, %v1389
        %1412 = vst.msk [vmem:[#allocation4 + $0x20] sm:$0xff] %vm611, %v1394
        %1413 = vst.msk [vmem:[#allocation4 + $0x28] sm:$0xff] %vm611, %v1397
        %1414 = vst.msk [vmem:[#allocation4 + $0x30] sm:$0xff] %vm611, %v1402
        %1415 = vst.msk [vmem:[#allocation4 + $0x38] sm:$0xff] %vm611, %v1405
        %v1416 = vld [vmem:[%s9] sm:$0xff]
        %v1417 = vld [vmem:[%s9 + $0x8] sm:$0xff]
        %v1418 = vld [vmem:[%s9 + $0x10] sm:$0xff]
        %v1419 = vld [vmem:[%s9 + $0x18] sm:$0xff]
        %v1420 = vld [vmem:[%s9 + $0x20] sm:$0xff]
        %v1421 = vld [vmem:[%s9 + $0x28] sm:$0xff]
        %v1422 = vld [vmem:[%s9 + $0x30] sm:$0xff]
        %v1423 = vld [vmem:[%s9 + $0x38] sm:$0xff]
        %v1424 = vld [vmem:[#allocation4] sm:$0xff]
        %v1425 = vld [vmem:[#allocation4 + $0x8] sm:$0xff]
        %v1426 = vld [vmem:[#allocation4 + $0x10] sm:$0xff]
        %v1427 = vld [vmem:[#allocation4 + $0x18] sm:$0xff]
        %v1428 = vld [vmem:[#allocation4 + $0x20] sm:$0xff]
        %v1429 = vld [vmem:[#allocation4 + $0x28] sm:$0xff]
        %v1430 = vld [vmem:[#allocation4 + $0x30] sm:$0xff]
        %v1431 = vld [vmem:[#allocation4 + $0x38] sm:$0xff]
        %v1432 = vpack.c.bf16 %v1425, %v1424
        %v1433 = vpack.c.bf16 %v1427, %v1426
        %v1434 = vpack.c.bf16 %v1429, %v1428
        %v1435 = vpack.c.bf16 %v1431, %v1430
        %1440 = vrot.lane.b32.xlu0 %v1432, 96
        %v1441 = vpop.permute.xlu0 %1440
        %1442 = vrot.lane.b32.xlu0 %v1433, 96
        %v1443 = vpop.permute.xlu0 %1442
        %1444 = vrot.lane.b32.xlu0 %v1434, 96
        %v1445 = vpop.permute.xlu0 %1444
        %1446 = vrot.lane.b32.xlu0 %v1435, 96
        %v1447 = vpop.permute.xlu0 %1446
        %v1449 = vsel %vm643, %v1432, 0
        %v1452 = vsel %vm643, %v1433, 0
        %v1455 = vsel %vm643, %v1434, 0
        %v1458 = vsel %vm643, %v1435, 0
        %v1461 = vsel %vm643, %v1441, 0
        %v1464 = vsel %vm643, %v1443, 0
        %v1467 = vsel %vm643, %v1445, 0
        %v1470 = vsel %vm643, %v1447, 0
        %1472 = vmatprep.subr.bf16.mxu0 0
        %1473 = vmatpush1.bf16.xpose.msra.mxu0 0
        %1474 = vmatprep.subr.bf16.mxu0 0
        %1475 = vmatpush1.bf16.xpose.msra.mxu0 0
        %1476 = vmatprep.subr.bf16.mxu0 0
        %1477 = vmatpush1.bf16.xpose.msra.mxu0 0
        %1478 = vmatprep.subr.bf16.mxu0 0
        %1479 = vmatpush1.bf16.xpose.msra.mxu0 0
        %1480 = vmatprep.subr.bf16.mxu0 0
        %1481 = vmatpush1.bf16.xpose.msra.mxu0 %v1470
        %1482 = vmatprep.subr.bf16.mxu0 0
        %1483 = vmatpush1.bf16.xpose.msra.mxu0 %v1467
        %1484 = vmatprep.subr.bf16.mxu0 0
        %1485 = vmatpush1.bf16.xpose.msra.mxu0 %v1464
        %1486 = vmatprep.subr.bf16.mxu0 0
        %1487 = vmatpush1.bf16.xpose.msra.mxu0 %v1461
        %1488 = vmatprep.subr.bf16.mxu0 0
        %1489 = vmatpush2.bf16.xpose.msra.mxu0 0
        %1490 = vmatprep.subr.bf16.mxu0 0
        %1491 = vmatpush2.bf16.xpose.msra.mxu0 0
        %1492 = vmatprep.subr.bf16.mxu0 0
        %1493 = vmatpush2.bf16.xpose.msra.mxu0 0
        %1494 = vmatprep.subr.bf16.mxu0 0
        %1495 = vmatpush2.bf16.xpose.msra.mxu0 0
        %1496 = vmatprep.subr.bf16.mxu0 0
        %1497 = vmatpush2.bf16.xpose.msra.mxu0 0
        %1498 = vmatprep.subr.bf16.mxu0 0
        %1499 = vmatpush2.bf16.xpose.msra.mxu0 0
        %1500 = vmatprep.subr.bf16.mxu0 0
        %1501 = vmatpush2.bf16.xpose.msra.mxu0 0
        %1502 = vmatprep.subr.bf16.mxu0 0
        %1503 = vmatpush2.bf16.xpose.msra.mxu0 0
        %1504 = vmatprep.mubr.bf16.mxu0 0
        %1505 = vmatmul.mubr.bf16.gmra.mxu0 %v1449
        %v1506 = vpop.f32.mrf.mxu0
        %v1507 = vadd.f32 0.0, %v1506
        %v1508 = vpop.f32.mrf.mxu0
        %v1509 = vpop.f32.mrf.mxu0
        %v1510 = vadd.f32 0.0, %v1509
        %v1511 = vpop.f32.mrf.mxu0
        %1512 = vmatprep.mubr.bf16.mxu0 0
        %1513 = vmatmul.mubr.bf16.gmra.mxu0 %v1452
        %v1514 = vpop.f32.mrf.mxu0
        %v1515 = vadd.f32 0.0, %v1514
        %v1516 = vpop.f32.mrf.mxu0
        %v1517 = vpop.f32.mrf.mxu0
        %v1518 = vadd.f32 0.0, %v1517
        %v1519 = vpop.f32.mrf.mxu0
        %1520 = vmatprep.mubr.bf16.mxu0 0
        %1521 = vmatmul.mubr.bf16.gmra.mxu0 %v1455
        %v1522 = vpop.f32.mrf.mxu0
        %v1523 = vadd.f32 0.0, %v1522
        %v1524 = vpop.f32.mrf.mxu0
        %v1525 = vpop.f32.mrf.mxu0
        %v1526 = vadd.f32 0.0, %v1525
        %v1527 = vpop.f32.mrf.mxu0
        %1528 = vmatprep.mubr.bf16.mxu0 0
        %1529 = vmatmul.mubr.bf16.gmra.mxu0 %v1458
        %v1530 = vpop.f32.mrf.mxu0
        %v1531 = vadd.f32 0.0, %v1530
        %v1532 = vpop.f32.mrf.mxu0
        %v1533 = vpop.f32.mrf.mxu0
        %v1534 = vadd.f32 0.0, %v1533
        %v1535 = vpop.f32.mrf.mxu0
        %1536 = vdwg.mxu0
        %v1537 = vmul.f32 %v1507, 0.17677669
        %v1538 = vmul.f32 %v1510, 0.17677669
        %v1539 = vmul.f32 %v1515, 0.17677669
        %v1540 = vmul.f32 %v1518, 0.17677669
        %v1541 = vmul.f32 %v1523, 0.17677669
        %v1542 = vmul.f32 %v1526, 0.17677669
        %v1543 = vmul.f32 %v1531, 0.17677669
        %v1544 = vmul.f32 %v1534, 0.17677669
        %v1545 = vadd.f32 %v1537, %v1416
        %v1546 = vadd.f32 %v1538, %v1417
        %v1547 = vadd.f32 %v1539, %v1418
        %v1548 = vadd.f32 %v1540, %v1419
        %v1549 = vadd.f32 %v1541, %v1420
        %v1550 = vadd.f32 %v1542, %v1421
        %v1551 = vadd.f32 %v1543, %v1422
        %v1552 = vadd.f32 %v1544, %v1423
        %vm1553 = vcmask 523264
        %v1554 = vsel %vm1553, %v1545, -inf
        %1555 = vmax.xlane.f32.xlu0 %v1554
        %v1556 = vpop.xlane.xlu0 %1555
        %v1557 = vsel %vm1553, %v1546, -inf
        %1558 = vmax.xlane.f32.xlu0 %v1557
        %v1559 = vpop.xlane.xlu0 %1558
        %v1560 = vsel %vm1553, %v1547, -inf
        %1561 = vmax.xlane.f32.xlu0 %v1560
        %v1562 = vpop.xlane.xlu0 %1561
        %v1563 = vsel %vm1553, %v1548, -inf
        %1564 = vmax.xlane.f32.xlu0 %v1563
        %v1565 = vpop.xlane.xlu0 %1564
        %v1566 = vsel %vm1553, %v1549, -inf
        %1567 = vmax.xlane.f32.xlu0 %v1566
        %v1568 = vpop.xlane.xlu0 %1567
        %v1569 = vsel %vm1553, %v1550, -inf
        %1570 = vmax.xlane.f32.xlu0 %v1569
        %v1571 = vpop.xlane.xlu0 %1570
        %v1572 = vsel %vm1553, %v1551, -inf
        %1573 = vmax.xlane.f32.xlu0 %v1572
        %v1574 = vpop.xlane.xlu0 %1573
        %v1575 = vsel %vm1553, %v1552, -inf
        %1576 = vmax.xlane.f32.xlu0 %v1575
        %v1577 = vpop.xlane.xlu0 %1576
        %v1578 = vsub.f32 %v1545, %v1556
        %v1579 = vsub.f32 %v1546, %v1559
        %v1580 = vsub.f32 %v1547, %v1562
        %v1581 = vsub.f32 %v1548, %v1565
        %v1582 = vsub.f32 %v1549, %v1568
        %v1583 = vsub.f32 %v1550, %v1571
        %v1584 = vsub.f32 %v1551, %v1574
        %v1585 = vsub.f32 %v1552, %v1577
        %v1586 = vmul.f32 %v1578, 1.442695
        %v1587 = vpow.pop %v1586
        %v1588 = vmul.f32 %v1579, 1.442695
        %v1589 = vpow.pop %v1588
        %v1590 = vmul.f32 %v1580, 1.442695
        %v1591 = vpow.pop %v1590
        %v1592 = vmul.f32 %v1581, 1.442695
        %v1593 = vpow.pop %v1592
        %v1594 = vmul.f32 %v1582, 1.442695
        %v1595 = vpow.pop %v1594
        %v1596 = vmul.f32 %v1583, 1.442695
        %v1597 = vpow.pop %v1596
        %v1598 = vmul.f32 %v1584, 1.442695
        %v1599 = vpow.pop %v1598
        %v1600 = vmul.f32 %v1585, 1.442695
        %v1601 = vpow.pop %v1600
        %v1602 = vsel %vm1553, %v1587, 0.0
        %1603 = vadd.xlane.f32.xlu0 %v1602
        %v1604 = vpop.xlane.xlu0 %1603
        %v1605 = vsel %vm1553, %v1589, 0.0
        %1606 = vadd.xlane.f32.xlu0 %v1605
        %v1607 = vpop.xlane.xlu0 %1606
        %v1608 = vsel %vm1553, %v1591, 0.0
        %1609 = vadd.xlane.f32.xlu0 %v1608
        %v1610 = vpop.xlane.xlu0 %1609
        %v1611 = vsel %vm1553, %v1593, 0.0
        %1612 = vadd.xlane.f32.xlu0 %v1611
        %v1613 = vpop.xlane.xlu0 %1612
        %v1614 = vsel %vm1553, %v1595, 0.0
        %1615 = vadd.xlane.f32.xlu0 %v1614
        %v1616 = vpop.xlane.xlu0 %1615
        %v1617 = vsel %vm1553, %v1597, 0.0
        %1618 = vadd.xlane.f32.xlu0 %v1617
        %v1619 = vpop.xlane.xlu0 %1618
        %v1620 = vsel %vm1553, %v1599, 0.0
        %1621 = vadd.xlane.f32.xlu0 %v1620
        %v1622 = vpop.xlane.xlu0 %1621
        %v1623 = vsel %vm1553, %v1601, 0.0
        %1624 = vadd.xlane.f32.xlu0 %v1623
        %v1625 = vpop.xlane.xlu0 %1624
        %v1626 = vrcp.pop %v1604
        %v1627 = vrcp.pop %v1607
        %v1628 = vrcp.pop %v1610
        %v1629 = vrcp.pop %v1613
        %v1630 = vrcp.pop %v1616
        %v1631 = vrcp.pop %v1619
        %v1632 = vrcp.pop %v1622
        %v1633 = vrcp.pop %v1625
        %v1634 = vmul.f32 %v1587, %v1626
        %v1635 = vmul.f32 %v1589, %v1627
        %v1636 = vmul.f32 %v1591, %v1628
        %v1637 = vmul.f32 %v1593, %v1629
        %v1638 = vmul.f32 %v1595, %v1630
        %v1639 = vmul.f32 %v1597, %v1631
        %v1640 = vmul.f32 %v1599, %v1632
        %v1641 = vmul.f32 %v1601, %v1633
        %v1642 = vpack.c.bf16 %v1635, %v1634
        %v1643 = vpack.c.bf16 %v1637, %v1636
        %v1644 = vpack.c.bf16 %v1639, %v1638
        %v1645 = vpack.c.bf16 %v1641, %v1640
        %1646 = vrot.lane.b32.xlu0 %v1432, 64
        %v1647 = vpop.permute.xlu0 %1646
        %1648 = vrot.lane.b32.xlu0 %v1433, 64
        %v1649 = vpop.permute.xlu0 %1648
        %1650 = vrot.lane.b32.xlu0 %v1434, 64
        %v1651 = vpop.permute.xlu0 %1650
        %1652 = vrot.lane.b32.xlu0 %v1435, 64
        %v1653 = vpop.permute.xlu0 %1652
        %v1659 = vsel %vm1553, %v1642, 0
        %v1662 = vsel %vm1553, %v1643, 0
        %v1665 = vsel %vm1553, %v1644, 0
        %v1668 = vsel %vm1553, %v1645, 0
        %1670 = vmatprep.subr.bf16.mxu0 0
        %1671 = vmatpush1.bf16.msra.mxu0 0
        %1672 = vmatprep.subr.bf16.mxu0 0
        %1673 = vmatpush1.bf16.msra.mxu0 0
        %1674 = vmatprep.subr.bf16.mxu0 0
        %1675 = vmatpush1.bf16.msra.mxu0 0
        %1676 = vmatprep.subr.bf16.mxu0 0
        %1677 = vmatpush1.bf16.msra.mxu0 0
        %1678 = vmatprep.subr.bf16.mxu0 0
        %1679 = vmatpush1.bf16.msra.mxu0 %v1653
        %1680 = vmatprep.subr.bf16.mxu0 0
        %1681 = vmatpush1.bf16.msra.mxu0 %v1651
        %1682 = vmatprep.subr.bf16.mxu0 0
        %1683 = vmatpush1.bf16.msra.mxu0 %v1649
        %1684 = vmatprep.subr.bf16.mxu0 0
        %1685 = vmatpush1.bf16.msra.mxu0 %v1647
        %1686 = vmatprep.subr.bf16.mxu0 0
        %1687 = vmatpush2.bf16.msra.mxu0 0
        %1688 = vmatprep.subr.bf16.mxu0 0
        %1689 = vmatpush2.bf16.msra.mxu0 0
        %1690 = vmatprep.subr.bf16.mxu0 0
        %1691 = vmatpush2.bf16.msra.mxu0 0
        %1692 = vmatprep.subr.bf16.mxu0 0
        %1693 = vmatpush2.bf16.msra.mxu0 0
        %1694 = vmatprep.subr.bf16.mxu0 0
        %1695 = vmatpush2.bf16.msra.mxu0 0
        %1696 = vmatprep.subr.bf16.mxu0 0
        %1697 = vmatpush2.bf16.msra.mxu0 0
        %1698 = vmatprep.subr.bf16.mxu0 0
        %1699 = vmatpush2.bf16.msra.mxu0 0
        %1700 = vmatprep.subr.bf16.mxu0 0
        %1701 = vmatpush2.bf16.msra.mxu0 0
        %1702 = vmatprep.mubr.bf16.mxu0 0
        %1703 = vmatmul.mubr.bf16.gmra.mxu0 %v1659
        %v1704 = vpop.f32.mrf.mxu0
        %v1705 = vadd.f32 0.0, %v1704
        %v1706 = vpop.f32.mrf.mxu0
        %v1707 = vpop.f32.mrf.mxu0
        %v1708 = vadd.f32 0.0, %v1707
        %v1709 = vpop.f32.mrf.mxu0
        %1710 = vmatprep.mubr.bf16.mxu0 0
        %1711 = vmatmul.mubr.bf16.gmra.mxu0 %v1662
        %v1712 = vpop.f32.mrf.mxu0
        %v1713 = vadd.f32 0.0, %v1712
        %v1714 = vpop.f32.mrf.mxu0
        %v1715 = vpop.f32.mrf.mxu0
        %v1716 = vadd.f32 0.0, %v1715
        %v1717 = vpop.f32.mrf.mxu0
        %1718 = vmatprep.mubr.bf16.mxu0 0
        %1719 = vmatmul.mubr.bf16.gmra.mxu0 %v1665
        %v1720 = vpop.f32.mrf.mxu0
        %v1721 = vadd.f32 0.0, %v1720
        %v1722 = vpop.f32.mrf.mxu0
        %v1723 = vpop.f32.mrf.mxu0
        %v1724 = vadd.f32 0.0, %v1723
        %v1725 = vpop.f32.mrf.mxu0
        %1726 = vmatprep.mubr.bf16.mxu0 0
        %1727 = vmatmul.mubr.bf16.gmra.mxu0 %v1668
        %v1728 = vpop.f32.mrf.mxu0
        %v1729 = vadd.f32 0.0, %v1728
        %v1730 = vpop.f32.mrf.mxu0
        %v1731 = vpop.f32.mrf.mxu0
        %v1732 = vadd.f32 0.0, %v1731
        %v1733 = vpop.f32.mrf.mxu0
        %1734 = vdwg.mxu0
        %v1735 = vld [vmem:[#allocation3] sm:$0xff]
        %v1736 = vld [vmem:[#allocation3 + $0x8] sm:$0xff]
        %v1737 = vld [vmem:[#allocation3 + $0x10] sm:$0xff]
        %v1738 = vld [vmem:[#allocation3 + $0x18] sm:$0xff]
        %v1739 = vld [vmem:[#allocation3 + $0x20] sm:$0xff]
        %v1740 = vld [vmem:[#allocation3 + $0x28] sm:$0xff]
        %v1741 = vld [vmem:[#allocation3 + $0x30] sm:$0xff]
        %v1742 = vld [vmem:[#allocation3 + $0x38] sm:$0xff]
        %v1743 = vmul.f32 %v1705, %v1735
        %v1744 = vmul.f32 %v1708, %v1736
        %v1745 = vmul.f32 %v1713, %v1737
        %v1746 = vmul.f32 %v1716, %v1738
        %v1747 = vmul.f32 %v1721, %v1739
        %v1748 = vmul.f32 %v1724, %v1740
        %v1749 = vmul.f32 %v1729, %v1741
        %v1750 = vmul.f32 %v1732, %v1742
        %v1751 = vsel %vm643, %v1743, 0.0
        %v1752 = vsel %vm643, %v1744, 0.0
        %v1753 = vadd.f32 %v1751, %v1752
        %v1754 = vsel %vm643, %v1745, 0.0
        %v1755 = vadd.f32 %v1753, %v1754
        %v1756 = vsel %vm643, %v1746, 0.0
        %v1757 = vadd.f32 %v1755, %v1756
        %v1758 = vsel %vm643, %v1747, 0.0
        %v1759 = vadd.f32 %v1757, %v1758
        %v1760 = vsel %vm643, %v1748, 0.0
        %v1761 = vadd.f32 %v1759, %v1760
        %v1762 = vsel %vm643, %v1749, 0.0
        %v1763 = vadd.f32 %v1761, %v1762
        %v1764 = vsel %vm643, %v1750, 0.0
        %v1765 = vadd.f32 %v1763, %v1764
        %v1766 = vpack.c.bf16 %v1765, %v1765
        %v1767 = vld [vmem:[%s7] sm:$0xf]
        %v1768 = vld [vmem:[%s7 + $0x4] sm:$0xf]
        %v1769 = vld [vmem:[%s7 + $0x8] sm:$0xf]
        %v1770 = vld [vmem:[%s7 + $0xc] sm:$0xf]
        %v1771 = vld [vmem:[#allocation14] sm:$0x1]
        %v1773 = vlaneseq
        %v1774 = vshrl.u32 %v1773, 7
        %v1775 = vsub.s32 0, %v1774
        %v1776 = vrot.slane %v1771, %v1775
        %v1782 = vunpack.c.l.b16 %v1767
        %v1783 = vunpack.c.l.b16 %v1768
        %v1784 = vunpack.c.l.b16 %v1769
        %v1785 = vunpack.c.l.b16 %v1770
        %v1786 = vpack.c.b16 %v1783, %v1782
        %v1787 = vpack.c.b16 %v1785, %v1784
        %v1791 = vsel %vm643, %v1766, 0
        %1793 = vmatprep.subr.bf16.mxu0 0
        %1794 = vmatpush1.bf16.msra.mxu0 0
        %1795 = vmatprep.subr.bf16.mxu0 0
        %1796 = vmatpush1.bf16.msra.mxu0 0
        %1797 = vmatprep.subr.bf16.mxu0 0
        %1798 = vmatpush1.bf16.msra.mxu0 0
        %1799 = vmatprep.subr.bf16.mxu0 0
        %1800 = vmatpush1.bf16.msra.mxu0 0
        %1801 = vmatprep.subr.bf16.mxu0 0
        %1802 = vmatpush1.bf16.msra.mxu0 0
        %1803 = vmatprep.subr.bf16.mxu0 0
        %1804 = vmatpush1.bf16.msra.mxu0 0
        %1805 = vmatprep.subr.bf16.mxu0 0
        %1806 = vmatpush1.bf16.msra.mxu0 %v1787
        %1807 = vmatprep.subr.bf16.mxu0 0
        %1808 = vmatpush1.bf16.msra.mxu0 %v1786
        %1809 = vmatprep.subr.bf16.mxu0 0
        %1810 = vmatpush2.bf16.msra.mxu0 0
        %1811 = vmatprep.subr.bf16.mxu0 0
        %1812 = vmatpush2.bf16.msra.mxu0 0
        %1813 = vmatprep.subr.bf16.mxu0 0
        %1814 = vmatpush2.bf16.msra.mxu0 0
        %1815 = vmatprep.subr.bf16.mxu0 0
        %1816 = vmatpush2.bf16.msra.mxu0 0
        %1817 = vmatprep.subr.bf16.mxu0 0
        %1818 = vmatpush2.bf16.msra.mxu0 0
        %1819 = vmatprep.subr.bf16.mxu0 0
        %1820 = vmatpush2.bf16.msra.mxu0 0
        %1821 = vmatprep.subr.bf16.mxu0 0
        %1822 = vmatpush2.bf16.msra.mxu0 0
        %1823 = vmatprep.subr.bf16.mxu0 0
        %1824 = vmatpush2.bf16.msra.mxu0 0
        %1825 = vmatprep.mubr.bf16.mxu0 0
        %1826 = vmatmul.mubr.bf16.gmra.mxu0 %v1791
        %v1827 = vpop.f32.mrf.mxu0
        %v1828 = vadd.f32 %v1776, %v1827
        %v1829 = vpop.f32.mrf.mxu0
        %v1830 = vpop.f32.mrf.mxu0
        %v1831 = vpop.f32.mrf.mxu0
        %1832 = vdwg.mxu0
        %v1833 = vtanh.pop %v1828
        %1834 = vst [vmem:[%s491] sm:$0xff] %v1833
        %s1835 = sand.u32 %s250, 1
        %s1836 = scalar_lea.sflag [#allocation8], %s1835
        %s1837 = sand.u32 %s250, 1
        %s1838 = smul.addr %s1837, 8
        %s1839 = scalar_lea.vmem [#allocation15], %s1838
        // Predicated region
        $region122: #{tpu_custom_call.1} parent=96 // pred_check
          %p1840 = pneg %p260
        $region123: #{tpu_custom_call.1} parent=96 // pred_check_branch
          %1842 = sbr.rel (%p1840) target = $region125
        $region124: #{tpu_custom_call.1} parent=96 // pred_region
          %s1844 = ssub.s32 128, 128
          %1845 = vsyncadd %s1836, %s1844
          %s1846 = smul.addr %s27, 128
          %s1847 = scalar_lea.hbm %s10, %s1846
          %s1849 = sshll.u32 %s1839, 4
          %s1850 = int_to_ptr.vmem [resolvable:$true] %s1849
          %1852 = dma.vmem_to_hbm [thread:$0]  %s1850, 128, %s1847, %s1836
        $region125: #{tpu_custom_call.1} parent=96 // pred_fallthru
          _
      $region97: #{tpu_custom_call.1} parent=5 // pred_fallthru
        _
      %p1853 = scmp.le.s32.totalorder 2, %s22
      // Predicated region
      $region126: #{tpu_custom_call.1} parent=5 // pred_check
        %p1854 = pneg %p1853
      $region127: #{tpu_custom_call.1} parent=5 // pred_check_branch
        %1856 = sbr.rel (%p1854) target = $region129
      $region128: #{tpu_custom_call.1} parent=5 // pred_region
        %s1857 = ssub.s32 %s22, 2
        // Predicated region
        $region130: #{tpu_custom_call.1} parent=128 // pred_check
          %p1858 = pneg %p266
        $region131: #{tpu_custom_call.1} parent=128 // pred_check_branch
          %1860 = sbr.rel (%p1858) target = $region133
        $region132: #{tpu_custom_call.1} parent=128 // pred_region
          %s1861 = sand.u32 %s251, 1
          %s1862 = scalar_lea.sflag [#allocation8], %s1861
          %s1863 = sand.u32 %s251, 1
          %s1864 = smul.addr %s1863, 8
          %s1865 = scalar_lea.vmem [#allocation15], %s1864
          %1866 = dma.done %s1862, 128
        $region133: #{tpu_custom_call.1} parent=128 // pred_fallthru
          _
      $region129: #{tpu_custom_call.1} parent=5 // pred_fallthru
        _
    $region6: #{tpu_custom_call.1} parent=1 // loop_footer
      %s26 = sadd.s32 1, %s22
    $region7: #{tpu_custom_call.1} parent=1 // loop_footer_branch
      %21 = sbr.rel target = $region3
    $region8: #{tpu_custom_call.1} parent=1 // loop_exit
      _
    %1867 = vsyncpa [#allocation7], 1
    %s1868 = scalar_lea.sflag [#allocation7], 1
    %1869 = vsyncpa %s1868, 1
    %1870 = vsyncpa [#allocation10], 1
    %1871 = vsyncpa [#allocation13], 1
    %1872 = vsyncpa [#allocation8], 1
    %s1873 = scalar_lea.sflag [#allocation8], 1
    %1874 = vsyncpa %s1873, 1

</llo_original>
